<compile_context>
chip_gen: v5e
topology: v5e:2x2
jax: 0.10.0
libtpu: 0.0.40
codegen_flags: <defaults>
</compile_context>

<pallas_src>
import functools
from typing import NamedTuple

import jax
import jax.numpy as jnp
from jax.experimental import pallas as pl
from jax.experimental.pallas import tpu as pltpu


def _round_up(x, m):
    return ((x + m - 1) // m) * m


# ----------------------------------------------------------------------------
# Pallas kernel: fused 3-head MLP forward
#   refs = (x, tanh_mask, w_0..w_{L-1}, b_0..b_{L-1}, out)
# 2-D weight ref  -> one MXU dot (column-concat / block-diagonal layer)
# 3-D weight ref  -> per-head stacked hidden layer: three aligned dots
# ----------------------------------------------------------------------------
def _gmm_head_kernel(*refs, n_layers, h_pad):
    x_ref = refs[0]
    mask_ref = refs[1]
    w_refs = refs[2:2 + n_layers]
    b_refs = refs[2 + n_layers:2 + 2 * n_layers]
    o_ref = refs[2 + 2 * n_layers]

    def mxu_dot(lhs, w):
        # bf16 weights -> cast activations so the MXU runs at its bf16 rate;
        # accumulation stays f32 either way.
        if w.dtype != jnp.float32:
            lhs = lhs.astype(w.dtype)
        return jnp.dot(lhs, w, preferred_element_type=jnp.float32)

    h = x_ref[...].astype(jnp.float32)
    for i in range(n_layers):
        w_ref = w_refs[i]
        if len(w_ref.shape) == 3:
            # Per-head stacked hidden layer: (n_heads, h_pad, h_pad).  Slices
            # are at 128-lane-aligned offsets, avoiding the 3x FLOP / bytes of
            # the block-diagonal matmul at larger hidden_dim.
            n_heads = w_ref.shape[0]
            parts = [mxu_dot(h[:, k * h_pad:(k + 1) * h_pad], w_ref[k])
                     for k in range(n_heads)]
            h = jnp.concatenate(parts, axis=1)
        else:
            h = mxu_dot(h, w_ref[...])
        h = h + b_refs[i][...]             # (1, N) bias broadcasts over batch
        if i < n_layers - 1:
            h = jnp.maximum(h, 0.0)        # hidden activation: relu

    # MixtureOfGaussian applies tanh to the means only.  The mask is a
    # precomputed (1, out_pad) f32 constant (no per-step iota/compare).
    h = jnp.where(mask_ref[...] > 0.5, jnp.tanh(h), h)
    o_ref[...] = h.astype(o_ref.dtype)     # lane-dense (TB, 128k) store


# ----------------------------------------------------------------------------
# Wrapper: one pallas_call for the whole head
# ----------------------------------------------------------------------------
def _choose_tb(B):
    if B <= 128:
        return _round_up(max(B, 1), 8)          # single block
    # Large batch: tiles up to 1024 rows (>=512 rows reaches ~85% of the HBM
    # roofline), but keep at least 2 grid steps so the "parallel" axis can
    # shard across v7x's two TensorCores.
    n_steps = max(2, pl.cdiv(B, 1024))
    return _round_up(pl.cdiv(B, n_steps), 8)


def gmm_head_fused_forward(x, tanh_mask, fused_ws, fused_bs, *, h_pad):
    n_layers = len(fused_ws)
    B, input_dim = x.shape
    out_pad = fused_ws[-1].shape[-1]

    TB = _choose_tb(B)
    grid = (pl.cdiv(B, TB),)   # partial last block handled by the pipeline

    kernel = functools.partial(_gmm_head_kernel, n_layers=n_layers, h_pad=h_pad)

    def nbytes(a):
        return int(a.size) * a.dtype.itemsize

    const_bytes = (nbytes(tanh_mask)
                   + sum(nbytes(w) for w in fused_ws)
                   + sum(nbytes(b) for b in fused_bs))
    stream_bytes = 2 * (TB * input_dim * x.dtype.itemsize + TB * out_pad * 4)

    try:  # per-generation VMEM capacity (v5e/v6e 128 MiB, v7x 64 MiB)
        cap = int(getattr(pltpu.get_tpu_info(), "vmem_capacity_bytes", 64 << 20))
    except Exception:
        cap = 64 << 20

    flops = 2 * grid[0] * TB * sum(
        (w.shape[0] * w.shape[1] * w.shape[2]) if w.ndim == 3
        else (w.shape[0] * w.shape[1])
        for w in fused_ws)
    bytes_accessed = nbytes(x) + const_bytes + B * out_pad * 4
    cost = pl.CostEstimate(flops=int(flops),
                           transcendentals=int(grid[0] * TB * out_pad),
                           bytes_accessed=int(bytes_accessed))

    def build(single_buffer):
        def const_spec(arr):
            idx = lambda i, _nd=arr.ndim: (0,) * _nd
            kwargs = {"pipeline_mode": pl.Buffered(1)} if single_buffer else {}
            return pl.BlockSpec(arr.shape, idx, **kwargs)

        in_specs = [pl.BlockSpec((TB, input_dim), lambda i: (i, 0)),
                    const_spec(tanh_mask)]
        in_specs += [const_spec(w) for w in fused_ws]
        in_specs += [const_spec(b) for b in fused_bs]
        out_specs = pl.BlockSpec((TB, out_pad), lambda i: (i, 0))

        weight_mult = 1 if single_buffer else 2
        need = stream_bytes + weight_mult * const_bytes
        vmem_budget = min(int(cap * 0.75), max(int(need * 1.5), 8 << 20))

        return pl.pallas_call(
            kernel,
            out_shape=jax.ShapeDtypeStruct((B, out_pad), jnp.float32),
            grid=grid,
            in_specs=in_specs,
            out_specs=out_specs,
            compiler_params=pltpu.CompilerParams(
                dimension_semantics=("parallel",),
                vmem_limit_bytes=vmem_budget),
            cost_estimate=cost,
        )

    args = (x, tanh_mask, *fused_ws, *fused_bs)
    try:
        return build(single_buffer=True)(*args)
    except Exception:
        # pipeline_mode=pl.Buffered(1) unsupported in this jax version:
        # fall back to default double-buffered constant inputs (same math).
        return build(single_buffer=False)(*args)


# ----------------------------------------------------------------------------
# Parameter construction (mirrors build_mlp / GMMHead init shapes)
# ----------------------------------------------------------------------------
def _init_linear(key, in_dim, out_dim):
    kw, kb = jax.random.split(key)
    bound = 1.0 / jnp.sqrt(in_dim)  # PyTorch default uniform bound
    w = jax.random.uniform(kw, (in_dim, out_dim), jnp.float32, -bound, bound)
    b = jax.random.uniform(kb, (out_dim,), jnp.float32, -bound, bound)
    return w, b


def _init_mlp(key, input_dim, hidden_dim, output_dim, hidden_depth):
    """build_mlp: hidden_depth hidden layers with relu, then output Linear."""
    dims = [input_dim] + [hidden_dim] * hidden_depth + [output_dim]
    keys = jax.random.split(key, len(dims) - 1)
    ws, bs = [], []
    for k, din, dout in zip(keys, dims[:-1], dims[1:]):
        w, b = _init_linear(k, din, dout)
        ws.append(w)
        bs.append(b)
    return ws, bs


def _orthogonal(key, in_dim, out_dim, gain):
    # nn.init.orthogonal_ on the (out, in) PyTorch weight; stored here as (in, out).
    a = jax.random.normal(key, (max(in_dim, out_dim), min(in_dim, out_dim)), jnp.float32)
    q, r = jnp.linalg.qr(a)
    q = q * jnp.sign(jnp.diagonal(r))
    if in_dim < out_dim:
        q = q.T
    return gain * q[:in_dim, :out_dim]


def _fuse_heads(heads_ws, heads_bs, *, input_dim, n_modes, mean_width, out_pad,
                weight_dtype, per_head_hidden):
    """Merge the three heads into one stack of lane-padded layers.

    Layout of hidden activations: each head owns a 128-aligned h_pad segment.
    Padded lanes stay exactly 0 through every layer (0*w + 0 bias, relu(0)=0),
    so they never perturb the math.
    """
    n_heads = len(heads_ws)
    n_layers = len(heads_ws[0])
    final_offs = [0, n_modes, n_modes + mean_width]

    if n_layers == 1:
        # hidden_depth == 0: a single Linear per head, all reading the same x.
        w_p = jnp.zeros((input_dim, out_pad), jnp.float32)
        b_p = jnp.zeros((1, out_pad), jnp.float32)
        for k in range(n_heads):
            w = heads_ws[k][0]
            b = heads_bs[k][0]
            w_p = w_p.at[:, final_offs[k]:final_offs[k] + w.shape[1]].set(w)
            b_p = b_p.at[0, final_offs[k]:final_offs[k] + b.shape[0]].set(b)
        return [w_p.astype(weight_dtype)], [b_p], 0

    hidden = heads_ws[0][0].shape[1]
    # NOTE: on v6e/v7x rounding a 128<h<=256 hidden width up to 256 would fill
    # the 256x256 MXU; kept at 128-multiples (exact fit on v5e, minor here).
    h_pad = _round_up(hidden, 128)
    fused_ws, fused_bs = [], []

    # layer 0: all heads read x -> column-concat, one head per h_pad segment.
    w0 = jnp.zeros((input_dim, n_heads * h_pad), jnp.float32)
    b0 = jnp.zeros((1, n_heads * h_pad), jnp.float32)
    for k in range(n_heads):
        w0 = w0.at[:, k * h_pad:k * h_pad + hidden].set(heads_ws[k][0])
        b0 = b0.at[0, k * h_pad:k * h_pad + hidden].set(heads_bs[k][0])
    fused_ws.append(w0.astype(weight_dtype))
    fused_bs.append(b0)

    # hidden -> hidden layers (independent per-head paths).
    for layer in range(1, n_layers - 1):
        if per_head_hidden:
            w = jnp.zeros((n_heads, h_pad, h_pad), jnp.float32)
            for k in range(n_heads):
                w = w.at[k, :hidden, :hidden].set(heads_ws[k][layer])
        else:
            w = jnp.zeros((n_heads * h_pad, n_heads * h_pad), jnp.float32)
            for k in range(n_heads):
                w = w.at[k * h_pad:k * h_pad + hidden,
                         k * h_pad:k * h_pad + hidden].set(heads_ws[k][layer])
        b = jnp.zeros((1, n_heads * h_pad), jnp.float32)
        for k in range(n_heads):
            b = b.at[0, k * h_pad:k * h_pad + hidden].set(heads_bs[k][layer])
        fused_ws.append(w.astype(weight_dtype))
        fused_bs.append(b)

    # final layer: block-diag rows per head, columns packed [logits|means|scales].
    wf = jnp.zeros((n_heads * h_pad, out_pad), jnp.float32)
    bf = jnp.zeros((1, out_pad), jnp.float32)
    for k in range(n_heads):
        w = heads_ws[k][-1]
        b = heads_bs[k][-1]
        wf = wf.at[k * h_pad:k * h_pad + hidden,
                   final_offs[k]:final_offs[k] + w.shape[1]].set(w)
        bf = bf.at[0, final_offs[k]:final_offs[k] + b.shape[0]].set(b)
    fused_ws.append(wf.astype(weight_dtype))
    fused_bs.append(bf)
    return fused_ws, fused_bs, h_pad


class MixtureOfGaussianParams(NamedTuple):
    logits: jax.Array   # (..., n_modes)
    means: jax.Array    # (..., n_modes, action_dim)  (tanh already applied)
    scales: jax.Array   # (..., n_modes, action_dim)  (raw; softplus applied in loss)


class GMMHeadPallas:
    def __init__(self, key, input_dim, *, n_modes=5, action_dim, hidden_dim,
                 hidden_depth, mean_mlp_last_layer_gain=0.01, low_noise_eval=True,
                 weight_dtype=jnp.bfloat16, per_head_hidden=None):
        k_logits, k_mean, k_scale, k_orth = jax.random.split(key, 4)
        self.n_modes = n_modes
        self.action_dim = action_dim
        self.low_noise_eval = low_noise_eval
        self.input_dim = input_dim
        self.weight_dtype = weight_dtype
        if per_head_hidden is None:
            # Block-diag fusion is 3x-wasteful in bytes/FLOPs; switch to
            # per-head stacked dots once the hidden width is non-trivial.
            per_head_hidden = hidden_dim >= 256

        # Per-head parameters (kept in f32 for the reference check).
        self.logits_w, self.logits_b = _init_mlp(
            k_logits, input_dim, hidden_dim, n_modes, hidden_depth)
        self.mean_w, self.mean_b = _init_mlp(
            k_mean, input_dim, hidden_dim, n_modes * action_dim, hidden_depth)
        if mean_mlp_last_layer_gain is not None:
            last_in = self.mean_w[-1].shape[0]
            self.mean_w[-1] = _orthogonal(
                k_orth, last_in, n_modes * action_dim, mean_mlp_last_layer_gain)
            # NOTE: as in the PyTorch module, only the last-layer *weight* is
            # re-initialized; the bias keeps its default init.
        self.scale_w, self.scale_b = _init_mlp(
            k_scale, input_dim, hidden_dim, n_modes * action_dim, hidden_depth)

        # Fuse the three heads once at init time (concat / per-head stacks /
        # block-diag final, all padded to 128 lanes, weights in bf16).
        M = n_modes * action_dim
        self.total_out = n_modes + 2 * M
        self.out_pad = _round_up(self.total_out, 128)
        self.fused_w, self.fused_b, self.h_pad = _fuse_heads(
            [self.logits_w, self.mean_w, self.scale_w],
            [self.logits_b, self.mean_b, self.scale_b],
            input_dim=input_dim, n_modes=n_modes, mean_width=M,
            out_pad=self.out_pad, weight_dtype=weight_dtype,
            per_head_hidden=per_head_hidden)
        # Precomputed tanh mask over the [logits|means|scales|pad] lane layout.
        self.tanh_mask = jnp.zeros((1, self.out_pad), jnp.float32).at[
            0, n_modes:n_modes + M].set(1.0)

    def __call__(self, x):
        # x: (B, input_dim) -> single fused kernel, then split in JAX glue.
        B = x.shape[0]
        M = self.n_modes * self.action_dim
        out = gmm_head_fused_forward(
            x, self.tanh_mask, self.fused_w, self.fused_b, h_pad=self.h_pad)
        logits = out[:, :self.n_modes]
        means = out[:, self.n_modes:self.n_modes + M].reshape(
            B, self.n_modes, self.action_dim)
        scales = out[:, self.n_modes + M:self.n_modes + 2 * M].reshape(
            B, self.n_modes, self.action_dim)
        return MixtureOfGaussianParams(logits=logits, means=means, scales=scales)


# ----------------------------------------------------------------------------
# Pure-JAX references (correctness sanity checks)
# ----------------------------------------------------------------------------
def _ref_mlp(x, ws, bs, weight_dtype=jnp.float32, final_act=None):
    """weight_dtype=bf16 emulates the kernel's bf16 MXU / f32-accum numerics."""
    h = x.astype(jnp.float32)
    for i, (w, b) in enumerate(zip(ws, bs)):
        if weight_dtype != jnp.float32:
            h = jnp.dot(h.astype(weight_dtype), w.astype(weight_dtype),
                        preferred_element_type=jnp.float32) + b
        else:
            h = h @ w + b
        if i < len(ws) - 1:
            h = jnp.maximum(h, 0.0)
    if final_act == "tanh":
        h = jnp.tanh(h)
    return h


# TODO(synk): MixtureOfGaussian.mode / imitation_loss / imitation_accuracy use
# torch.distributions sampling + NLL; only the forward parameter head is kernelized.

if __name__ == "__main__":
    key = jax.random.PRNGKey(0)

    # Config 1 exercises the small/block-diag path (B<=128, partial row block);
    # config 2 exercises the per-head stacked hidden path, a 2-step grid and a
    # clipped partial last batch block (no wrapper-side padding copy).
    configs = [
        dict(batch=7, input_dim=32, hidden_dim=32, hidden_depth=2,
             n_modes=5, action_dim=4),
        dict(batch=200, input_dim=48, hidden_dim=256, hidden_depth=2,
             n_modes=5, action_dim=6),
    ]

    for cfg in configs:
        key, k_params, k_x = jax.random.split(key, 3)
        head = GMMHeadPallas(
            k_params, cfg["input_dim"],
            n_modes=cfg["n_modes"], action_dim=cfg["action_dim"],
            hidden_dim=cfg["hidden_dim"], hidden_depth=cfg["hidden_depth"],
            mean_mlp_last_layer_gain=0.01, low_noise_eval=True)

        B = cfg["batch"]
        x = jax.random.normal(k_x, (B, cfg["input_dim"]), jnp.float32)

        dist = head(x)
        jax.block_until_ready(dist)

        n_modes, action_dim = cfg["n_modes"], cfg["action_dim"]
        assert dist.logits.shape == (B, n_modes)
        assert dist.means.shape == (B, n_modes, action_dim)
        assert dist.scales.shape == (B, n_modes, action_dim)

        # Tight check against a reference that emulates the kernel's bf16
        # weight / f32 accumulation numerics.
        wd = head.weight_dtype
        ref_logits = _ref_mlp(x, head.logits_w, head.logits_b, weight_dtype=wd)
        ref_mean = _ref_mlp(x, head.mean_w, head.mean_b, weight_dtype=wd,
                            final_act="tanh").reshape(B, n_modes, action_dim)
        ref_scale = _ref_mlp(x, head.scale_w, head.scale_b,
                             weight_dtype=wd).reshape(B, n_modes, action_dim)
        assert jnp.allclose(dist.logits, ref_logits, atol=5e-4, rtol=5e-4)
        assert jnp.allclose(dist.means, ref_mean, atol=5e-4, rtol=5e-4)
        assert jnp.allclose(dist.scales, ref_scale, atol=5e-4, rtol=5e-4)

        # Loose check against the full-f32 reference (bf16 quantization bound).
        f32_logits = _ref_mlp(x, head.logits_w, head.logits_b)
        f32_mean = _ref_mlp(x, head.mean_w, head.mean_b,
                            final_act="tanh").reshape(B, n_modes, action_dim)
        f32_scale = _ref_mlp(x, head.scale_w, head.scale_b).reshape(
            B, n_modes, action_dim)
        assert jnp.allclose(dist.logits, f32_logits, atol=5e-2, rtol=5e-2)
        assert jnp.allclose(dist.means, f32_mean, atol=5e-2, rtol=5e-2)
        assert jnp.allclose(dist.scales, f32_scale, atol=5e-2, rtol=5e-2)

    print("KERNEL_OK")
</pallas_src>

<mosaic_0001>
module attributes {stable_mosaic.version = 11 : i64} {
  func.func @_gmm_head_kernel(%arg0: i32, %arg1: memref<8x32xf32, #tpu.memory_space<vmem>>, %arg2: memref<1x128xf32, #tpu.memory_space<vmem>>, %arg3: memref<32x384xbf16, #tpu.memory_space<vmem>>, %arg4: memref<384x384xbf16, #tpu.memory_space<vmem>>, %arg5: memref<384x128xbf16, #tpu.memory_space<vmem>>, %arg6: memref<1x384xf32, #tpu.memory_space<vmem>>, %arg7: memref<1x384xf32, #tpu.memory_space<vmem>>, %arg8: memref<1x128xf32, #tpu.memory_space<vmem>>, %arg9: memref<8x128xf32, #tpu.memory_space<vmem>>) attributes {dimension_semantics = [#tpu.dimension_semantics<parallel>], iteration_bounds = array<i64: 1>, scalar_prefetch = 0 : i64, scratch_operands = 0 : i64, tpu.core_type = #tpu.core_type<tc>, window_params = [{transform_indices = @transform_0, window_bounds = array<i64: 8, 32>}, {pipeline_mode = #tpu.pipeline_mode<synchronous>, transform_indices = @transform_1, window_bounds = array<i64: 1, 128>}, {pipeline_mode = #tpu.pipeline_mode<synchronous>, transform_indices = @transform_2, window_bounds = array<i64: 32, 384>}, {pipeline_mode = #tpu.pipeline_mode<synchronous>, transform_indices = @transform_3, window_bounds = array<i64: 384, 384>}, {pipeline_mode = #tpu.pipeline_mode<synchronous>, transform_indices = @transform_4, window_bounds = array<i64: 384, 128>}, {pipeline_mode = #tpu.pipeline_mode<synchronous>, transform_indices = @transform_5, window_bounds = array<i64: 1, 384>}, {pipeline_mode = #tpu.pipeline_mode<synchronous>, transform_indices = @transform_6, window_bounds = array<i64: 1, 384>}, {pipeline_mode = #tpu.pipeline_mode<synchronous>, transform_indices = @transform_7, window_bounds = array<i64: 1, 128>}, {transform_indices = @transform_8, window_bounds = array<i64: 8, 128>}]} {
    %c0 = arith.constant 0 : index
    %c0_0 = arith.constant 0 : index
    %0 = vector.load %arg1[%c0, %c0_0] : memref<8x32xf32, #tpu.memory_space<vmem>>, vector<8x32xf32>
    %c0_1 = arith.constant 0 : index
    %c0_2 = arith.constant 0 : index
    %1 = vector.load %arg3[%c0_1, %c0_2] : memref<32x384xbf16, #tpu.memory_space<vmem>>, vector<32x384xbf16>
    %2 = arith.truncf %0 : vector<8x32xf32> to vector<8x32xbf16>
    %cst = arith.constant dense<0.000000e+00> : vector<8x384xf32>
    %3 = tpu.matmul %2, %1, %cst {dimension_numbers = #tpu.dot_dimension_numbers<[1], [0], [0], [1], [0, 0, 1, 1], [], []>} : vector<8x32xbf16>, vector<32x384xbf16>, vector<8x384xf32> -> vector<8x384xf32>
    %c0_3 = arith.constant 0 : index
    %c0_4 = arith.constant 0 : index
    %4 = vector.load %arg6[%c0_3, %c0_4] : memref<1x384xf32, #tpu.memory_space<vmem>>, vector<1x384xf32>
    %5 = vector.broadcast %4 : vector<1x384xf32> to vector<8x384xf32>
    %6 = arith.addf %3, %5 : vector<8x384xf32>
    %cst_5 = arith.constant 0.000000e+00 : f32
    %7 = vector.broadcast %cst_5 : f32 to vector<8x384xf32>
    %8 = arith.maximumf %6, %7 : vector<8x384xf32>
    %c0_6 = arith.constant 0 : index
    %c0_7 = arith.constant 0 : index
    %9 = vector.load %arg4[%c0_6, %c0_7] : memref<384x384xbf16, #tpu.memory_space<vmem>>, vector<384x384xbf16>
    %10 = arith.truncf %8 : vector<8x384xf32> to vector<8x384xbf16>
    %cst_8 = arith.constant dense<0.000000e+00> : vector<8x384xf32>
    %11 = tpu.matmul %10, %9, %cst_8 {dimension_numbers = #tpu.dot_dimension_numbers<[1], [0], [0], [1], [0, 0, 1, 1], [], []>} : vector<8x384xbf16>, vector<384x384xbf16>, vector<8x384xf32> -> vector<8x384xf32>
    %c0_9 = arith.constant 0 : index
    %c0_10 = arith.constant 0 : index
    %12 = vector.load %arg7[%c0_9, %c0_10] : memref<1x384xf32, #tpu.memory_space<vmem>>, vector<1x384xf32>
    %13 = vector.broadcast %12 : vector<1x384xf32> to vector<8x384xf32>
    %14 = arith.addf %11, %13 : vector<8x384xf32>
    %cst_11 = arith.constant 0.000000e+00 : f32
    %15 = vector.broadcast %cst_11 : f32 to vector<8x384xf32>
    %16 = arith.maximumf %14, %15 : vector<8x384xf32>
    %c0_12 = arith.constant 0 : index
    %c0_13 = arith.constant 0 : index
    %17 = vector.load %arg5[%c0_12, %c0_13] : memref<384x128xbf16, #tpu.memory_space<vmem>>, vector<384x128xbf16>
    %18 = arith.truncf %16 : vector<8x384xf32> to vector<8x384xbf16>
    %cst_14 = arith.constant dense<0.000000e+00> : vector<8x128xf32>
    %19 = tpu.matmul %18, %17, %cst_14 {dimension_numbers = #tpu.dot_dimension_numbers<[1], [0], [0], [1], [0, 0, 1, 1], [], []>} : vector<8x384xbf16>, vector<384x128xbf16>, vector<8x128xf32> -> vector<8x128xf32>
    %c0_15 = arith.constant 0 : index
    %c0_16 = arith.constant 0 : index
    %20 = vector.load %arg8[%c0_15, %c0_16] : memref<1x128xf32, #tpu.memory_space<vmem>>, vector<1x128xf32>
    %21 = vector.broadcast %20 : vector<1x128xf32> to vector<8x128xf32>
    %22 = arith.addf %19, %21 : vector<8x128xf32>
    %c0_17 = arith.constant 0 : index
    %c0_18 = arith.constant 0 : index
    %23 = vector.load %arg2[%c0_17, %c0_18] : memref<1x128xf32, #tpu.memory_space<vmem>>, vector<1x128xf32>
    %cst_19 = arith.constant 5.000000e-01 : f32
    %24 = vector.broadcast %cst_19 : f32 to vector<1x128xf32>
    %25 = arith.cmpf ogt, %23, %24 : vector<1x128xf32>
    %26 = math.tanh %22 : vector<8x128xf32>
    %27 = vector.shape_cast %25 : vector<1x128xi1> to vector<1x128xi1>
    %28 = vector.broadcast %27 : vector<1x128xi1> to vector<8x128xi1>
    %29 = arith.select %28, %26, %22 : vector<8x128xi1>, vector<8x128xf32>
    %c0_20 = arith.constant 0 : index
    %c0_21 = arith.constant 0 : index
    %30 = vector.load %arg9[%c0_20, %c0_21] : memref<8x128xf32, #tpu.memory_space<vmem>>, vector<8x128xf32>
    tpu.vector_store %arg9[%c0_20, %c0_21], %29 {strides = array<i32>} : memref<8x128xf32, #tpu.memory_space<vmem>>, vector<8x128xf32>,
    return
  }
  func.func @transform_0(%arg0: i32) -> (i32, i32) {
    %c0_i32 = arith.constant 0 : i32
    %c0_i32_0 = arith.constant 0 : i32
    return %arg0, %c0_i32 : i32, i32
  }
  func.func @transform_1(%arg0: i32) -> (i32, i32) {
    %c0_i32 = arith.constant 0 : i32
    %c0_i32_0 = arith.constant 0 : i32
    %c0_i32_1 = arith.constant 0 : i32
    return %c0_i32, %c0_i32_0 : i32, i32
  }
  func.func @transform_2(%arg0: i32) -> (i32, i32) {
    %c0_i32 = arith.constant 0 : i32
    %c0_i32_0 = arith.constant 0 : i32
    %c0_i32_1 = arith.constant 0 : i32
    return %c0_i32, %c0_i32_0 : i32, i32
  }
  func.func @transform_3(%arg0: i32) -> (i32, i32) {
    %c0_i32 = arith.constant 0 : i32
    %c0_i32_0 = arith.constant 0 : i32
    %c0_i32_1 = arith.constant 0 : i32
    return %c0_i32, %c0_i32_0 : i32, i32
  }
  func.func @transform_4(%arg0: i32) -> (i32, i32) {
    %c0_i32 = arith.constant 0 : i32
    %c0_i32_0 = arith.constant 0 : i32
    %c0_i32_1 = arith.constant 0 : i32
    return %c0_i32, %c0_i32_0 : i32, i32
  }
  func.func @transform_5(%arg0: i32) -> (i32, i32) {
    %c0_i32 = arith.constant 0 : i32
    %c0_i32_0 = arith.constant 0 : i32
    %c0_i32_1 = arith.constant 0 : i32
    return %c0_i32, %c0_i32_0 : i32, i32
  }
  func.func @transform_6(%arg0: i32) -> (i32, i32) {
    %c0_i32 = arith.constant 0 : i32
    %c0_i32_0 = arith.constant 0 : i32
    %c0_i32_1 = arith.constant 0 : i32
    return %c0_i32, %c0_i32_0 : i32, i32
  }
  func.func @transform_7(%arg0: i32) -> (i32, i32) {
    %c0_i32 = arith.constant 0 : i32
    %c0_i32_0 = arith.constant 0 : i32
    %c0_i32_1 = arith.constant 0 : i32
    return %c0_i32, %c0_i32_0 : i32, i32
  }
  func.func @transform_8(%arg0: i32) -> (i32, i32) {
    %c0_i32 = arith.constant 0 : i32
    %c0_i32_0 = arith.constant 0 : i32
    return %arg0, %c0_i32 : i32, i32
  }
}

module attributes {stable_mosaic.version = 11 : i64} {
  func.func @_gmm_head_kernel(%arg0: i32, %arg1: memref<8x32xf32, #tpu.memory_space<vmem>>, %arg2: memref<1x128xf32, #tpu.memory_space<vmem>>, %arg3: memref<32x384xbf16, #tpu.memory_space<vmem>>, %arg4: memref<384x384xbf16, #tpu.memory_space<vmem>>, %arg5: memref<384x128xbf16, #tpu.memory_space<vmem>>, %arg6: memref<1x384xf32, #tpu.memory_space<vmem>>, %arg7: memref<1x384xf32, #tpu.memory_space<vmem>>, %arg8: memref<1x128xf32, #tpu.memory_space<vmem>>, %arg9: memref<8x128xf32, #tpu.memory_space<vmem>>) attributes {dimension_semantics = [#tpu.dimension_semantics<parallel>], iteration_bounds = array<i64: 1>, scalar_prefetch = 0 : i64, scratch_operands = 0 : i64, tpu.core_type = #tpu.core_type<tc>, window_params = [{transform_indices = @transform_0, window_bounds = array<i64: 8, 32>}, {pipeline_mode = #tpu.pipeline_mode<synchronous>, transform_indices = @transform_1, window_bounds = array<i64: 1, 128>}, {pipeline_mode = #tpu.pipeline_mode<synchronous>, transform_indices = @transform_2, window_bounds = array<i64: 32, 384>}, {pipeline_mode = #tpu.pipeline_mode<synchronous>, transform_indices = @transform_3, window_bounds = array<i64: 384, 384>}, {pipeline_mode = #tpu.pipeline_mode<synchronous>, transform_indices = @transform_4, window_bounds = array<i64: 384, 128>}, {pipeline_mode = #tpu.pipeline_mode<synchronous>, transform_indices = @transform_5, window_bounds = array<i64: 1, 384>}, {pipeline_mode = #tpu.pipeline_mode<synchronous>, transform_indices = @transform_6, window_bounds = array<i64: 1, 384>}, {pipeline_mode = #tpu.pipeline_mode<synchronous>, transform_indices = @transform_7, window_bounds = array<i64: 1, 128>}, {transform_indices = @transform_8, window_bounds = array<i64: 8, 128>}]} {
    %c0 = arith.constant 0 : index
    %c0_0 = arith.constant 0 : index
    %0 = vector.load %arg1[%c0, %c0_0] : memref<8x32xf32, #tpu.memory_space<vmem>>, vector<8x32xf32>
    %c0_1 = arith.constant 0 : index
    %c0_2 = arith.constant 0 : index
    %1 = vector.load %arg3[%c0_1, %c0_2] : memref<32x384xbf16, #tpu.memory_space<vmem>>, vector<32x384xbf16>
    %2 = arith.truncf %0 : vector<8x32xf32> to vector<8x32xbf16>
    %cst = arith.constant dense<0.000000e+00> : vector<8x384xf32>
    %3 = tpu.matmul %2, %1, %cst {dimension_numbers = #tpu.dot_dimension_numbers<[1], [0], [0], [1], [0, 0, 1, 1], [], []>} : vector<8x32xbf16>, vector<32x384xbf16>, vector<8x384xf32> -> vector<8x384xf32>
    %c0_3 = arith.constant 0 : index
    %c0_4 = arith.constant 0 : index
    %4 = vector.load %arg6[%c0_3, %c0_4] : memref<1x384xf32, #tpu.memory_space<vmem>>, vector<1x384xf32>
    %5 = vector.broadcast %4 : vector<1x384xf32> to vector<8x384xf32>
    %6 = arith.addf %3, %5 : vector<8x384xf32>
    %cst_5 = arith.constant 0.000000e+00 : f32
    %7 = vector.broadcast %cst_5 : f32 to vector<8x384xf32>
    %8 = arith.maximumf %6, %7 : vector<8x384xf32>
    %c0_6 = arith.constant 0 : index
    %c0_7 = arith.constant 0 : index
    %9 = vector.load %arg4[%c0_6, %c0_7] : memref<384x384xbf16, #tpu.memory_space<vmem>>, vector<384x384xbf16>
    %10 = arith.truncf %8 : vector<8x384xf32> to vector<8x384xbf16>
    %cst_8 = arith.constant dense<0.000000e+00> : vector<8x384xf32>
    %11 = tpu.matmul %10, %9, %cst_8 {dimension_numbers = #tpu.dot_dimension_numbers<[1], [0], [0], [1], [0, 0, 1, 1], [], []>} : vector<8x384xbf16>, vector<384x384xbf16>, vector<8x384xf32> -> vector<8x384xf32>
    %c0_9 = arith.constant 0 : index
    %c0_10 = arith.constant 0 : index
    %12 = vector.load %arg7[%c0_9, %c0_10] : memref<1x384xf32, #tpu.memory_space<vmem>>, vector<1x384xf32>
    %13 = vector.broadcast %12 : vector<1x384xf32> to vector<8x384xf32>
    %14 = arith.addf %11, %13 : vector<8x384xf32>
    %cst_11 = arith.constant 0.000000e+00 : f32
    %15 = vector.broadcast %cst_11 : f32 to vector<8x384xf32>
    %16 = arith.maximumf %14, %15 : vector<8x384xf32>
    %c0_12 = arith.constant 0 : index
    %c0_13 = arith.constant 0 : index
    %17 = vector.load %arg5[%c0_12, %c0_13] : memref<384x128xbf16, #tpu.memory_space<vmem>>, vector<384x128xbf16>
    %18 = arith.truncf %16 : vector<8x384xf32> to vector<8x384xbf16>
    %cst_14 = arith.constant dense<0.000000e+00> : vector<8x128xf32>
    %19 = tpu.matmul %18, %17, %cst_14 {dimension_numbers = #tpu.dot_dimension_numbers<[1], [0], [0], [1], [0, 0, 1, 1], [], []>} : vector<8x384xbf16>, vector<384x128xbf16>, vector<8x128xf32> -> vector<8x128xf32>
    %c0_15 = arith.constant 0 : index
    %c0_16 = arith.constant 0 : index
    %20 = vector.load %arg8[%c0_15, %c0_16] : memref<1x128xf32, #tpu.memory_space<vmem>>, vector<1x128xf32>
    %21 = vector.broadcast %20 : vector<1x128xf32> to vector<8x128xf32>
    %22 = arith.addf %19, %21 : vector<8x128xf32>
    %c0_17 = arith.constant 0 : index
    %c0_18 = arith.constant 0 : index
    %23 = vector.load %arg2[%c0_17, %c0_18] : memref<1x128xf32, #tpu.memory_space<vmem>>, vector<1x128xf32>
    %cst_19 = arith.constant 5.000000e-01 : f32
    %24 = vector.broadcast %cst_19 : f32 to vector<1x128xf32>
    %25 = arith.cmpf ogt, %23, %24 : vector<1x128xf32>
    %26 = math.tanh %22 : vector<8x128xf32>
    %27 = vector.shape_cast %25 : vector<1x128xi1> to vector<1x128xi1>
    %28 = vector.broadcast %27 : vector<1x128xi1> to vector<8x128xi1>
    %29 = arith.select %28, %26, %22 : vector<8x128xi1>, vector<8x128xf32>
    %c0_20 = arith.constant 0 : index
    %c0_21 = arith.constant 0 : index
    %30 = vector.load %arg9[%c0_20, %c0_21] : memref<8x128xf32, #tpu.memory_space<vmem>>, vector<8x128xf32>
    tpu.vector_store %arg9[%c0_20, %c0_21], %29 {strides = array<i32>} : memref<8x128xf32, #tpu.memory_space<vmem>>, vector<8x128xf32>,
    return
  }
  func.func @transform_0(%arg0: i32) -> (i32, i32) {
    %c0_i32 = arith.constant 0 : i32
    %c0_i32_0 = arith.constant 0 : i32
    return %arg0, %c0_i32 : i32, i32
  }
  func.func @transform_1(%arg0: i32) -> (i32, i32) {
    %c0_i32 = arith.constant 0 : i32
    %c0_i32_0 = arith.constant 0 : i32
    %c0_i32_1 = arith.constant 0 : i32
    return %c0_i32, %c0_i32_0 : i32, i32
  }
  func.func @transform_2(%arg0: i32) -> (i32, i32) {
    %c0_i32 = arith.constant 0 : i32
    %c0_i32_0 = arith.constant 0 : i32
    %c0_i32_1 = arith.constant 0 : i32
    return %c0_i32, %c0_i32_0 : i32, i32
  }
  func.func @transform_3(%arg0: i32) -> (i32, i32) {
    %c0_i32 = arith.constant 0 : i32
    %c0_i32_0 = arith.constant 0 : i32
    %c0_i32_1 = arith.constant 0 : i32
    return %c0_i32, %c0_i32_0 : i32, i32
  }
  func.func @transform_4(%arg0: i32) -> (i32, i32) {
    %c0_i32 = arith.constant 0 : i32
    %c0_i32_0 = arith.constant 0 : i32
    %c0_i32_1 = arith.constant 0 : i32
    return %c0_i32, %c0_i32_0 : i32, i32
  }
  func.func @transform_5(%arg0: i32) -> (i32, i32) {
    %c0_i32 = arith.constant 0 : i32
    %c0_i32_0 = arith.constant 0 : i32
    %c0_i32_1 = arith.constant 0 : i32
    return %c0_i32, %c0_i32_0 : i32, i32
  }
  func.func @transform_6(%arg0: i32) -> (i32, i32) {
    %c0_i32 = arith.constant 0 : i32
    %c0_i32_0 = arith.constant 0 : i32
    %c0_i32_1 = arith.constant 0 : i32
    return %c0_i32, %c0_i32_0 : i32, i32
  }
  func.func @transform_7(%arg0: i32) -> (i32, i32) {
    %c0_i32 = arith.constant 0 : i32
    %c0_i32_0 = arith.constant 0 : i32
    %c0_i32_1 = arith.constant 0 : i32
    return %c0_i32, %c0_i32_0 : i32, i32
  }
  func.func @transform_8(%arg0: i32) -> (i32, i32) {
    %c0_i32 = arith.constant 0 : i32
    %c0_i32_0 = arith.constant 0 : i32
    return %arg0, %c0_i32 : i32, i32
  }
}

</mosaic_0001>

<llo_original>
// kernel: tpu_custom_call.1
$region0: #{tpu_custom_call.1}
  #allocation0 [shape = 'u32[]', space=smem, size = 0x4, offset = 0x4, fixed_abs, tag = 'smem constant byte address 0x4 - core index']
  #allocation1 [shape = 'u32[72,128]{1,0:T(1,128)}', space=vmem, size = 0x9000, scoped, tag = 'internal scratch']
  %s0 = inlined_call_operand.hbm [shape: f32[7,32], index: 0, kind: input, shape index: {}]
  %s1 = inlined_call_operand.hbm [shape: f32[1,128], index: 1, kind: input, shape index: {}]
  %s2 = inlined_call_operand.hbm [shape: bf16[32,384], index: 2, kind: input, shape index: {}]
  %s3 = inlined_call_operand.hbm [shape: bf16[384,384], index: 3, kind: input, shape index: {}]
  %s4 = inlined_call_operand.hbm [shape: bf16[384,128], index: 4, kind: input, shape index: {}]
  %s5 = inlined_call_operand.vmem [shape: f32[1,384], index: 5, kind: input, shape index: {}]
  %s6 = inlined_call_operand.hbm [shape: f32[1,384], index: 6, kind: input, shape index: {}]
  %s7 = inlined_call_operand.vmem [shape: f32[1,128], index: 7, kind: input, shape index: {}]
  %s8 = inlined_call_operand.hbm [shape: f32[7,128], index: 8, kind: output, shape index: {}]
  %s9 = sld [smem:[#allocation0]]
  $region66: #{tpu_custom_call.1} parent=0
    _
  %s11 = ssub.s32 1, %s9
  %s12 = scalar_select 0, %s11, %s9
  $region1: #{tpu_custom_call.1} parent=0
    #allocation2 [shape = 'u8[4096]{0}', space=vmem, size = 0x1000, scoped, tag = 'input window, operand 0, single buffered']
    #allocation3 [shape = 's32[1]{0}', space=sflag, size = 0x4, scoped, tag = 'scoped memory for tpu_custom_call.1']
    #allocation4 [shape = 's32[1]{0}', space=sflag, size = 0x4, scoped, tag = 'scoped memory for tpu_custom_call.1']
    #allocation5 [shape = 'u8[512]{0}', space=vmem, size = 0x400, scoped, tag = 'input window, operand 1, single buffered']
    #allocation6 [shape = 's32[1]{0}', space=sflag, size = 0x4, scoped, tag = 'scoped memory for tpu_custom_call.1']
    #allocation7 [shape = 'u8[24576]{0}', space=vmem, size = 0x6000, scoped, tag = 'input window, operand 2, single buffered']
    #allocation8 [shape = 'u8[294912]{0}', space=vmem, size = 0x48000, scoped, tag = 'input window, operand 3, single buffered']
    #allocation9 [shape = 's32[1]{0}', space=sflag, size = 0x4, scoped, tag = 'scoped memory for tpu_custom_call.1']
    #allocation10 [shape = 'u8[98304]{0}', space=vmem, size = 0x18000, scoped, tag = 'input window, operand 4, single buffered']
    #allocation11 [shape = 'u8[1536]{0}', space=vmem, size = 0x800, scoped, tag = 'input window, operand 6, single buffered']
    #allocation12 [shape = 's32[1]{0}', space=sflag, size = 0x4, scoped, tag = 'scoped memory for tpu_custom_call.1']
    #allocation13 [shape = 'u8[4096]{0}', space=vmem, size = 0x1000, scoped, tag = 'output window, operand 0, single buffered']
    %13 = vsyncpa [#allocation3], 0
    %14 = vsyncpa [#allocation6], 0
    %15 = vsyncpa [#allocation9], 0
    %16 = vsyncpa [#allocation12], 0
    %17 = vsyncpa [#allocation4], 0
    // Predicated region
    $region2: #{tpu_custom_call.1} parent=1 // pred_check
      _
    $region3: #{tpu_custom_call.1} parent=1 // pred_check_branch
      %19 = sbr.rel (0) target = $region5
    $region4: #{tpu_custom_call.1} parent=1 // pred_region
      %21 = vsyncadd [#allocation3], 0
      %s23 = sshll.u32 %s0, 4
      %s24 = int_to_ptr.hbm [resolvable:$true] %s23
      %s25 = sshll.u32 [#allocation2], 4
      %s26 = int_to_ptr.vmem [resolvable:$true] %s25
      %28 = dma.hbm_to_vmem [thread:$0]  %s24, 128, %s26, [#allocation3]
    $region5: #{tpu_custom_call.1} parent=1 // pred_fallthru
      _
    // Predicated region
    $region6: #{tpu_custom_call.1} parent=1 // pred_check
      _
    $region7: #{tpu_custom_call.1} parent=1 // pred_check_branch
      %30 = sbr.rel (0) target = $region9
    $region8: #{tpu_custom_call.1} parent=1 // pred_region
      %32 = vsyncadd [#allocation6], 0
      %s34 = sshll.u32 %s1, 4
      %s35 = int_to_ptr.hbm [resolvable:$true] %s34
      %s36 = sshll.u32 [#allocation5], 4
      %s37 = int_to_ptr.vmem [resolvable:$true] %s36
      %39 = dma.hbm_to_vmem [thread:$0]  %s35, 16, %s37, [#allocation6]
    $region9: #{tpu_custom_call.1} parent=1 // pred_fallthru
      _
    // Predicated region
    $region10: #{tpu_custom_call.1} parent=1 // pred_check
      _
    $region11: #{tpu_custom_call.1} parent=1 // pred_check_branch
      %41 = sbr.rel (0) target = $region13
    $region12: #{tpu_custom_call.1} parent=1 // pred_region
      %43 = vsyncadd [#allocation6], 0
      %s44 = sshll.u32 %s2, 4
      %s45 = int_to_ptr.hbm [resolvable:$true] %s44
      %s46 = sshll.u32 [#allocation7], 4
      %s47 = int_to_ptr.vmem [resolvable:$true] %s46
      %52 = dma.hbm_to_vmem [thread:$0]  %s45, 768, %s47, [#allocation6], 192, 192, 12
    $region13: #{tpu_custom_call.1} parent=1 // pred_fallthru
      _
    // Predicated region
    $region14: #{tpu_custom_call.1} parent=1 // pred_check
      _
    $region15: #{tpu_custom_call.1} parent=1 // pred_check_branch
      %54 = sbr.rel (0) target = $region17
    $region16: #{tpu_custom_call.1} parent=1 // pred_region
      %56 = vsyncadd [#allocation9], 0
      %s57 = sshll.u32 %s3, 4
      %s58 = int_to_ptr.hbm [resolvable:$true] %s57
      %s59 = sshll.u32 [#allocation8], 4
      %s60 = int_to_ptr.vmem [resolvable:$true] %s59
      %65 = dma.hbm_to_vmem [thread:$0]  %s58, 9216, %s60, [#allocation9], 192, 192, 12
    $region17: #{tpu_custom_call.1} parent=1 // pred_fallthru
      _
    // Predicated region
    $region18: #{tpu_custom_call.1} parent=1 // pred_check
      _
    $region19: #{tpu_custom_call.1} parent=1 // pred_check_branch
      %67 = sbr.rel (0) target = $region21
    $region20: #{tpu_custom_call.1} parent=1 // pred_region
      %69 = vsyncadd [#allocation9], 0
      %s70 = sshll.u32 %s4, 4
      %s71 = int_to_ptr.hbm [resolvable:$true] %s70
      %s72 = sshll.u32 [#allocation10], 4
      %s73 = int_to_ptr.vmem [resolvable:$true] %s72
      %78 = dma.hbm_to_vmem [thread:$0]  %s71, 3072, %s73, [#allocation9], 64, 64, 4
    $region21: #{tpu_custom_call.1} parent=1 // pred_fallthru
      _
    // Predicated region
    $region22: #{tpu_custom_call.1} parent=1 // pred_check
      _
    $region23: #{tpu_custom_call.1} parent=1 // pred_check_branch
      %80 = sbr.rel (0) target = $region25
    $region24: #{tpu_custom_call.1} parent=1 // pred_region
      _
    $region25: #{tpu_custom_call.1} parent=1 // pred_fallthru
      _
    // Predicated region
    $region26: #{tpu_custom_call.1} parent=1 // pred_check
      _
    $region27: #{tpu_custom_call.1} parent=1 // pred_check_branch
      %82 = sbr.rel (0) target = $region29
    $region28: #{tpu_custom_call.1} parent=1 // pred_region
      %84 = vsyncadd [#allocation12], 0
      %s86 = sshll.u32 %s6, 4
      %s87 = int_to_ptr.hbm [resolvable:$true] %s86
      %s88 = sshll.u32 [#allocation11], 4
      %s89 = int_to_ptr.vmem [resolvable:$true] %s88
      %91 = dma.hbm_to_vmem [thread:$0]  %s87, 48, %s89, [#allocation12]
    $region29: #{tpu_custom_call.1} parent=1 // pred_fallthru
      _
    // Predicated region
    $region30: #{tpu_custom_call.1} parent=1 // pred_check
      _
    $region31: #{tpu_custom_call.1} parent=1 // pred_check_branch
      %93 = sbr.rel (0) target = $region33
    $region32: #{tpu_custom_call.1} parent=1 // pred_region
      _
    $region33: #{tpu_custom_call.1} parent=1 // pred_fallthru
      _
    // Predicated region
    $region34: #{tpu_custom_call.1} parent=1 // pred_check
      _
    $region35: #{tpu_custom_call.1} parent=1 // pred_check_branch
      %95 = sbr.rel (0) target = $region37
    $region36: #{tpu_custom_call.1} parent=1 // pred_region
      %97 = dma.done [#allocation3], 128
    $region37: #{tpu_custom_call.1} parent=1 // pred_fallthru
      _
    // Predicated region
    $region38: #{tpu_custom_call.1} parent=1 // pred_check
      _
    $region39: #{tpu_custom_call.1} parent=1 // pred_check_branch
      %99 = sbr.rel (0) target = $region41
    $region40: #{tpu_custom_call.1} parent=1 // pred_region
      %101 = dma.done [#allocation6], 16
    $region41: #{tpu_custom_call.1} parent=1 // pred_fallthru
      _
    // Predicated region
    $region42: #{tpu_custom_call.1} parent=1 // pred_check
      _
    $region43: #{tpu_custom_call.1} parent=1 // pred_check_branch
      %103 = sbr.rel (0) target = $region45
    $region44: #{tpu_custom_call.1} parent=1 // pred_region
      %105 = dma.done [#allocation6], 768
    $region45: #{tpu_custom_call.1} parent=1 // pred_fallthru
      _
    // Predicated region
    $region46: #{tpu_custom_call.1} parent=1 // pred_check
      _
    $region47: #{tpu_custom_call.1} parent=1 // pred_check_branch
      %107 = sbr.rel (0) target = $region49
    $region48: #{tpu_custom_call.1} parent=1 // pred_region
      %109 = dma.done [#allocation9], 9216
    $region49: #{tpu_custom_call.1} parent=1 // pred_fallthru
      _
    // Predicated region
    $region50: #{tpu_custom_call.1} parent=1 // pred_check
      _
    $region51: #{tpu_custom_call.1} parent=1 // pred_check_branch
      %111 = sbr.rel (0) target = $region53
    $region52: #{tpu_custom_call.1} parent=1 // pred_region
      %113 = dma.done [#allocation9], 3072
    $region53: #{tpu_custom_call.1} parent=1 // pred_fallthru
      _
    // Predicated region
    $region54: #{tpu_custom_call.1} parent=1 // pred_check
      _
    $region55: #{tpu_custom_call.1} parent=1 // pred_check_branch
      %115 = sbr.rel (0) target = $region57
    $region56: #{tpu_custom_call.1} parent=1 // pred_region
      %117 = dma.done [#allocation12], 48
    $region57: #{tpu_custom_call.1} parent=1 // pred_fallthru
      _
    %v119 = vld [vmem:[#allocation2] sm:$0xff]
    %v120 = vld [vmem:[#allocation7] sm:$0xff]
    %v121 = vld [vmem:[#allocation7 + $0x8] sm:$0xf]
    %v122 = vld [vmem:[#allocation7 + $0xc] sm:$0xff]
    %v123 = vld [vmem:[#allocation7 + $0x14] sm:$0xf]
    %v124 = vld [vmem:[#allocation7 + $0x18] sm:$0xff]
    %v125 = vld [vmem:[#allocation7 + $0x20] sm:$0xf]
    %v126 = vld [vmem:[#allocation7 + $0x24] sm:$0xff]
    %v127 = vld [vmem:[#allocation7 + $0x2c] sm:$0xf]
    %v128 = vpack.c.bf16 %v119, %v119
    %v129 = vld [vmem:[%s5] sm:$0x7]
    %v131 = vperm.slane %v129, 0
    %v132 = vperm.slane %v129, 1
    %v133 = vperm.slane %v129, 2
    %v145 = vunpack.c.l.b16 %v120
    %v146 = vunpack.c.h.b16 %v120
    %v147 = vunpack.c.l.b16 %v121
    %v148 = vunpack.c.l.b16 %v122
    %v149 = vunpack.c.h.b16 %v122
    %v150 = vunpack.c.l.b16 %v123
    %v151 = vunpack.c.l.b16 %v124
    %v152 = vunpack.c.h.b16 %v124
    %v153 = vunpack.c.l.b16 %v125
    %v154 = vunpack.c.l.b16 %v126
    %v155 = vunpack.c.h.b16 %v126
    %v156 = vunpack.c.l.b16 %v127
    %v157 = vpack.c.b16 %v148, %v145
    %v158 = vpack.c.b16 %v149, %v146
    %v159 = vpack.c.b16 %v150, %v147
    %v160 = vpack.c.b16 %v154, %v151
    %v161 = vpack.c.b16 %v155, %v152
    %v162 = vpack.c.b16 %v156, %v153
    %vm169 = vcmask 261120
    %v171 = vsel %vm169, %v128, 0
    %173 = vmatpush.bf16.msra.mxu0 0
    %174 = vmatpush.bf16.msra.mxu0 0
    %175 = vmatpush.bf16.msra.mxu0 0
    %176 = vmatpush.bf16.msra.mxu0 0
    %177 = vmatpush.bf16.msra.mxu0 0
    %178 = vmatpush.bf16.msra.mxu0 0
    %179 = vmatpush.bf16.msra.mxu0 %v160
    %180 = vmatpush.bf16.msra.mxu0 %v157
    %181 = vmatmul.bf16.gmra.mxu0 %v171
    %v182 = vpop.f32.mrf.mxu0
    %v183 = vadd.f32 %v131, %v182
    %v184 = vpop.f32.mrf.mxu0
    %185 = vdwg.mxu0
    %186 = vmatpush.bf16.msra.mxu0 0
    %187 = vmatpush.bf16.msra.mxu0 0
    %188 = vmatpush.bf16.msra.mxu0 0
    %189 = vmatpush.bf16.msra.mxu0 0
    %190 = vmatpush.bf16.msra.mxu0 0
    %191 = vmatpush.bf16.msra.mxu0 0
    %192 = vmatpush.bf16.msra.mxu0 %v161
    %193 = vmatpush.bf16.msra.mxu0 %v158
    %194 = vmatmul.bf16.gmra.mxu0 %v171
    %v195 = vpop.f32.mrf.mxu0
    %v196 = vadd.f32 %v132, %v195
    %v197 = vpop.f32.mrf.mxu0
    %198 = vdwg.mxu0
    %199 = vmatpush.bf16.msra.mxu0 0
    %200 = vmatpush.bf16.msra.mxu0 0
    %201 = vmatpush.bf16.msra.mxu0 0
    %202 = vmatpush.bf16.msra.mxu0 0
    %203 = vmatpush.bf16.msra.mxu0 0
    %204 = vmatpush.bf16.msra.mxu0 0
    %205 = vmatpush.bf16.msra.mxu0 %v162
    %206 = vmatpush.bf16.msra.mxu0 %v159
    %207 = vmatmul.bf16.gmra.mxu0 %v171
    %v208 = vpop.f32.mrf.mxu0
    %v209 = vadd.f32 %v133, %v208
    %v210 = vpop.f32.mrf.mxu0
    %211 = vdwg.mxu0
    %v212 = vmax.f32 %v183, 0.0
    %v213 = vmax.f32 %v196, 0.0
    %v214 = vmax.f32 %v209, 0.0
    %v215 = vld [vmem:[#allocation8] sm:$0xff]
    %v216 = vld [vmem:[#allocation8 + $0x8] sm:$0xf]
    %v217 = vld [vmem:[#allocation8 + $0xc] sm:$0xff]
    %v218 = vld [vmem:[#allocation8 + $0x14] sm:$0xf]
    %v219 = vld [vmem:[#allocation8 + $0x18] sm:$0xff]
    %v220 = vld [vmem:[#allocation8 + $0x20] sm:$0xf]
    %v221 = vld [vmem:[#allocation8 + $0x24] sm:$0xff]
    %v222 = vld [vmem:[#allocation8 + $0x2c] sm:$0xf]
    %v223 = vld [vmem:[#allocation8 + $0x30] sm:$0xff]
    %v224 = vld [vmem:[#allocation8 + $0x38] sm:$0xf]
    %v225 = vld [vmem:[#allocation8 + $0x3c] sm:$0xff]
    %v226 = vld [vmem:[#allocation8 + $0x44] sm:$0xf]
    %v227 = vld [vmem:[#allocation8 + $0x48] sm:$0xff]
    %v228 = vld [vmem:[#allocation8 + $0x50] sm:$0xf]
    %v229 = vld [vmem:[#allocation8 + $0x54] sm:$0xff]
    %v230 = vld [vmem:[#allocation8 + $0x5c] sm:$0xf]
    %v231 = vld [vmem:[#allocation8 + $0x60] sm:$0xff]
    %v232 = vld [vmem:[#allocation8 + $0x68] sm:$0xf]
    %v233 = vld [vmem:[#allocation8 + $0x6c] sm:$0xff]
    %v234 = vld [vmem:[#allocation8 + $0x74] sm:$0xf]
    %v235 = vld [vmem:[#allocation8 + $0x78] sm:$0xff]
    %v236 = vld [vmem:[#allocation8 + $0x80] sm:$0xf]
    %v237 = vld [vmem:[#allocation8 + $0x84] sm:$0xff]
    %v238 = vld [vmem:[#allocation8 + $0x8c] sm:$0xf]
    %v239 = vld [vmem:[#allocation8 + $0x90] sm:$0xff]
    %v240 = vld [vmem:[#allocation8 + $0x98] sm:$0xf]
    %v241 = vld [vmem:[#allocation8 + $0x9c] sm:$0xff]
    %v242 = vld [vmem:[#allocation8 + $0xa4] sm:$0xf]
    %v243 = vld [vmem:[#allocation8 + $0xa8] sm:$0xff]
    %v244 = vld [vmem:[#allocation8 + $0xb0] sm:$0xf]
    %v245 = vld [vmem:[#allocation8 + $0xb4] sm:$0xff]
    %v246 = vld [vmem:[#allocation8 + $0xbc] sm:$0xf]
    %v247 = vld [vmem:[#allocation8 + $0xc0] sm:$0xff]
    %v248 = vld [vmem:[#allocation8 + $0xc8] sm:$0xf]
    %v249 = vld [vmem:[#allocation8 + $0xcc] sm:$0xff]
    %v250 = vld [vmem:[#allocation8 + $0xd4] sm:$0xf]
    %v251 = vld [vmem:[#allocation8 + $0xd8] sm:$0xff]
    %v252 = vld [vmem:[#allocation8 + $0xe0] sm:$0xf]
    %v253 = vld [vmem:[#allocation8 + $0xe4] sm:$0xff]
    %v254 = vld [vmem:[#allocation8 + $0xec] sm:$0xf]
    %v255 = vld [vmem:[#allocation8 + $0xf0] sm:$0xff]
    %v256 = vld [vmem:[#allocation8 + $0xf8] sm:$0xf]
    %v257 = vld [vmem:[#allocation8 + $0xfc] sm:$0xff]
    %v258 = vld [vmem:[#allocation8 + $0x104] sm:$0xf]
    %v259 = vld [vmem:[#allocation8 + $0x108] sm:$0xff]
    %v260 = vld [vmem:[#allocation8 + $0x110] sm:$0xf]
    %v261 = vld [vmem:[#allocation8 + $0x114] sm:$0xff]
    %v262 = vld [vmem:[#allocation8 + $0x11c] sm:$0xf]
    %v263 = vld [vmem:[#allocation8 + $0x120] sm:$0xff]
    %v264 = vld [vmem:[#allocation8 + $0x128] sm:$0xf]
    %v265 = vld [vmem:[#allocation8 + $0x12c] sm:$0xff]
    %v266 = vld [vmem:[#allocation8 + $0x134] sm:$0xf]
    %v267 = vld [vmem:[#allocation8 + $0x138] sm:$0xff]
    %v268 = vld [vmem:[#allocation8 + $0x140] sm:$0xf]
    %v269 = vld [vmem:[#allocation8 + $0x144] sm:$0xff]
    %v270 = vld [vmem:[#allocation8 + $0x14c] sm:$0xf]
    %v271 = vld [vmem:[#allocation8 + $0x150] sm:$0xff]
    %v272 = vld [vmem:[#allocation8 + $0x158] sm:$0xf]
    %v273 = vld [vmem:[#allocation8 + $0x15c] sm:$0xff]
    %v274 = vld [vmem:[#allocation8 + $0x164] sm:$0xf]
    %v275 = vld [vmem:[#allocation8 + $0x168] sm:$0xff]
    %v276 = vld [vmem:[#allocation8 + $0x170] sm:$0xf]
    %v277 = vld [vmem:[#allocation8 + $0x174] sm:$0xff]
    %v278 = vld [vmem:[#allocation8 + $0x17c] sm:$0xf]
    %v279 = vld [vmem:[#allocation8 + $0x180] sm:$0xff]
    %v280 = vld [vmem:[#allocation8 + $0x188] sm:$0xf]
    %v281 = vld [vmem:[#allocation8 + $0x18c] sm:$0xff]
    %v282 = vld [vmem:[#allocation8 + $0x194] sm:$0xf]
    %v283 = vld [vmem:[#allocation8 + $0x198] sm:$0xff]
    %v284 = vld [vmem:[#allocation8 + $0x1a0] sm:$0xf]
    %v285 = vld [vmem:[#allocation8 + $0x1a4] sm:$0xff]
    %v286 = vld [vmem:[#allocation8 + $0x1ac] sm:$0xf]
    %v287 = vld [vmem:[#allocation8 + $0x1b0] sm:$0xff]
    %v288 = vld [vmem:[#allocation8 + $0x1b8] sm:$0xf]
    %v289 = vld [vmem:[#allocation8 + $0x1bc] sm:$0xff]
    %v290 = vld [vmem:[#allocation8 + $0x1c4] sm:$0xf]
    %v291 = vld [vmem:[#allocation8 + $0x1c8] sm:$0xff]
    %v292 = vld [vmem:[#allocation8 + $0x1d0] sm:$0xf]
    %v293 = vld [vmem:[#allocation8 + $0x1d4] sm:$0xff]
    %v294 = vld [vmem:[#allocation8 + $0x1dc] sm:$0xf]
    %v295 = vld [vmem:[#allocation8 + $0x1e0] sm:$0xff]
    %v296 = vld [vmem:[#allocation8 + $0x1e8] sm:$0xf]
    %v297 = vld [vmem:[#allocation8 + $0x1ec] sm:$0xff]
    %v298 = vld [vmem:[#allocation8 + $0x1f4] sm:$0xf]
    %v299 = vld [vmem:[#allocation8 + $0x1f8] sm:$0xff]
    %v300 = vld [vmem:[#allocation8 + $0x200] sm:$0xf]
    %v301 = vld [vmem:[#allocation8 + $0x204] sm:$0xff]
    %v302 = vld [vmem:[#allocation8 + $0x20c] sm:$0xf]
    %v303 = vld [vmem:[#allocation8 + $0x210] sm:$0xff]
    %v304 = vld [vmem:[#allocation8 + $0x218] sm:$0xf]
    %v305 = vld [vmem:[#allocation8 + $0x21c] sm:$0xff]
    %v306 = vld [vmem:[#allocation8 + $0x224] sm:$0xf]
    %v307 = vld [vmem:[#allocation8 + $0x228] sm:$0xff]
    %v308 = vld [vmem:[#allocation8 + $0x230] sm:$0xf]
    %v309 = vld [vmem:[#allocation8 + $0x234] sm:$0xff]
    %v310 = vld [vmem:[#allocation8 + $0x23c] sm:$0xf]
    %v311 = vpack.c.bf16 %v212, %v212
    %v312 = vpack.c.bf16 %v213, %v213
    %v313 = vpack.c.bf16 %v214, %v214
    %v314 = vld [vmem:[#allocation11] sm:$0x7]
    %v316 = vperm.slane %v314, 0
    %v317 = vperm.slane %v314, 1
    %v318 = vperm.slane %v314, 2
    %v418 = vunpack.c.l.b16 %v215
    %v419 = vunpack.c.h.b16 %v215
    %v420 = vunpack.c.l.b16 %v216
    %v421 = vunpack.c.l.b16 %v217
    %v422 = vunpack.c.h.b16 %v217
    %v423 = vunpack.c.l.b16 %v218
    %v424 = vunpack.c.l.b16 %v219
    %v425 = vunpack.c.h.b16 %v219
    %v426 = vunpack.c.l.b16 %v220
    %v427 = vunpack.c.l.b16 %v221
    %v428 = vunpack.c.h.b16 %v221
    %v429 = vunpack.c.l.b16 %v222
    %v430 = vunpack.c.l.b16 %v223
    %v431 = vunpack.c.h.b16 %v223
    %v432 = vunpack.c.l.b16 %v224
    %v433 = vunpack.c.l.b16 %v225
    %v434 = vunpack.c.h.b16 %v225
    %v435 = vunpack.c.l.b16 %v226
    %v436 = vunpack.c.l.b16 %v227
    %v437 = vunpack.c.h.b16 %v227
    %v438 = vunpack.c.l.b16 %v228
    %v439 = vunpack.c.l.b16 %v229
    %v440 = vunpack.c.h.b16 %v229
    %v441 = vunpack.c.l.b16 %v230
    %v442 = vunpack.c.l.b16 %v231
    %v443 = vunpack.c.h.b16 %v231
    %v444 = vunpack.c.l.b16 %v232
    %v445 = vunpack.c.l.b16 %v233
    %v446 = vunpack.c.h.b16 %v233
    %v447 = vunpack.c.l.b16 %v234
    %v448 = vunpack.c.l.b16 %v235
    %v449 = vunpack.c.h.b16 %v235
    %v450 = vunpack.c.l.b16 %v236
    %v451 = vunpack.c.l.b16 %v237
    %v452 = vunpack.c.h.b16 %v237
    %v453 = vunpack.c.l.b16 %v238
    %v454 = vunpack.c.l.b16 %v239
    %v455 = vunpack.c.h.b16 %v239
    %v456 = vunpack.c.l.b16 %v240
    %v457 = vunpack.c.l.b16 %v241
    %v458 = vunpack.c.h.b16 %v241
    %v459 = vunpack.c.l.b16 %v242
    %v460 = vunpack.c.l.b16 %v243
    %v461 = vunpack.c.h.b16 %v243
    %v462 = vunpack.c.l.b16 %v244
    %v463 = vunpack.c.l.b16 %v245
    %v464 = vunpack.c.h.b16 %v245
    %v465 = vunpack.c.l.b16 %v246
    %v466 = vunpack.c.l.b16 %v247
    %v467 = vunpack.c.h.b16 %v247
    %v468 = vunpack.c.l.b16 %v248
    %v469 = vunpack.c.l.b16 %v249
    %v470 = vunpack.c.h.b16 %v249
    %v471 = vunpack.c.l.b16 %v250
    %v472 = vunpack.c.l.b16 %v251
    %v473 = vunpack.c.h.b16 %v251
    %v474 = vunpack.c.l.b16 %v252
    %v475 = vunpack.c.l.b16 %v253
    %v476 = vunpack.c.h.b16 %v253
    %v477 = vunpack.c.l.b16 %v254
    %v478 = vunpack.c.l.b16 %v255
    %v479 = vunpack.c.h.b16 %v255
    %v480 = vunpack.c.l.b16 %v256
    %v481 = vunpack.c.l.b16 %v257
    %v482 = vunpack.c.h.b16 %v257
    %v483 = vunpack.c.l.b16 %v258
    %v484 = vunpack.c.l.b16 %v259
    %v485 = vunpack.c.h.b16 %v259
    %v486 = vunpack.c.l.b16 %v260
    %v487 = vunpack.c.l.b16 %v261
    %v488 = vunpack.c.h.b16 %v261
    %v489 = vunpack.c.l.b16 %v262
    %v490 = vunpack.c.l.b16 %v263
    %v491 = vunpack.c.h.b16 %v263
    %v492 = vunpack.c.l.b16 %v264
    %v493 = vunpack.c.l.b16 %v265
    %v494 = vunpack.c.h.b16 %v265
    %v495 = vunpack.c.l.b16 %v266
    %v496 = vunpack.c.l.b16 %v267
    %v497 = vunpack.c.h.b16 %v267
    %v498 = vunpack.c.l.b16 %v268
    %v499 = vunpack.c.l.b16 %v269
    %v500 = vunpack.c.h.b16 %v269
    %v501 = vunpack.c.l.b16 %v270
    %v502 = vunpack.c.l.b16 %v271
    %v503 = vunpack.c.h.b16 %v271
    %v504 = vunpack.c.l.b16 %v272
    %v505 = vunpack.c.l.b16 %v273
    %v506 = vunpack.c.h.b16 %v273
    %v507 = vunpack.c.l.b16 %v274
    %v508 = vunpack.c.l.b16 %v275
    %v509 = vunpack.c.h.b16 %v275
    %v510 = vunpack.c.l.b16 %v276
    %v511 = vunpack.c.l.b16 %v277
    %v512 = vunpack.c.h.b16 %v277
    %v513 = vunpack.c.l.b16 %v278
    %v514 = vunpack.c.l.b16 %v279
    %v515 = vunpack.c.h.b16 %v279
    %v516 = vunpack.c.l.b16 %v280
    %v517 = vunpack.c.l.b16 %v281
    %v518 = vunpack.c.h.b16 %v281
    %v519 = vunpack.c.l.b16 %v282
    %v520 = vunpack.c.l.b16 %v283
    %v521 = vunpack.c.h.b16 %v283
    %v522 = vunpack.c.l.b16 %v284
    %v523 = vunpack.c.l.b16 %v285
    %v524 = vunpack.c.h.b16 %v285
    %v525 = vunpack.c.l.b16 %v286
    %v526 = vunpack.c.l.b16 %v287
    %v527 = vunpack.c.h.b16 %v287
    %v528 = vunpack.c.l.b16 %v288
    %v529 = vunpack.c.l.b16 %v289
    %v530 = vunpack.c.h.b16 %v289
    %v531 = vunpack.c.l.b16 %v290
    %v532 = vunpack.c.l.b16 %v291
    %v533 = vunpack.c.h.b16 %v291
    %v534 = vunpack.c.l.b16 %v292
    %v535 = vunpack.c.l.b16 %v293
    %v536 = vunpack.c.h.b16 %v293
    %v537 = vunpack.c.l.b16 %v294
    %v538 = vunpack.c.l.b16 %v295
    %v539 = vunpack.c.h.b16 %v295
    %v540 = vunpack.c.l.b16 %v296
    %v541 = vunpack.c.l.b16 %v297
    %v542 = vunpack.c.h.b16 %v297
    %v543 = vunpack.c.l.b16 %v298
    %v544 = vunpack.c.l.b16 %v299
    %v545 = vunpack.c.h.b16 %v299
    %v546 = vunpack.c.l.b16 %v300
    %v547 = vunpack.c.l.b16 %v301
    %v548 = vunpack.c.h.b16 %v301
    %v549 = vunpack.c.l.b16 %v302
    %v550 = vunpack.c.l.b16 %v303
    %v551 = vunpack.c.h.b16 %v303
    %v552 = vunpack.c.l.b16 %v304
    %v553 = vunpack.c.l.b16 %v305
    %v554 = vunpack.c.h.b16 %v305
    %v555 = vunpack.c.l.b16 %v306
    %v556 = vunpack.c.l.b16 %v307
    %v557 = vunpack.c.h.b16 %v307
    %v558 = vunpack.c.l.b16 %v308
    %v559 = vunpack.c.l.b16 %v309
    %v560 = vunpack.c.h.b16 %v309
    %v561 = vunpack.c.l.b16 %v310
    %v562 = vpack.c.b16 %v421, %v418
    %v563 = vpack.c.b16 %v422, %v419
    %v564 = vpack.c.b16 %v423, %v420
    %v565 = vpack.c.b16 %v427, %v424
    %v566 = vpack.c.b16 %v428, %v425
    %v567 = vpack.c.b16 %v429, %v426
    %v568 = vpack.c.b16 %v433, %v430
    %v569 = vpack.c.b16 %v434, %v431
    %v570 = vpack.c.b16 %v435, %v432
    %v571 = vpack.c.b16 %v439, %v436
    %v572 = vpack.c.b16 %v440, %v437
    %v573 = vpack.c.b16 %v441, %v438
    %v574 = vpack.c.b16 %v445, %v442
    %v575 = vpack.c.b16 %v446, %v443
    %v576 = vpack.c.b16 %v447, %v444
    %v577 = vpack.c.b16 %v451, %v448
    %v578 = vpack.c.b16 %v452, %v449
    %v579 = vpack.c.b16 %v453, %v450
    %v580 = vpack.c.b16 %v457, %v454
    %v581 = vpack.c.b16 %v458, %v455
    %v582 = vpack.c.b16 %v459, %v456
    %v583 = vpack.c.b16 %v463, %v460
    %v584 = vpack.c.b16 %v464, %v461
    %v585 = vpack.c.b16 %v465, %v462
    %v586 = vpack.c.b16 %v469, %v466
    %v587 = vpack.c.b16 %v470, %v467
    %v588 = vpack.c.b16 %v471, %v468
    %v589 = vpack.c.b16 %v475, %v472
    %v590 = vpack.c.b16 %v476, %v473
    %v591 = vpack.c.b16 %v477, %v474
    %v592 = vpack.c.b16 %v481, %v478
    %v593 = vpack.c.b16 %v482, %v479
    %v594 = vpack.c.b16 %v483, %v480
    %v595 = vpack.c.b16 %v487, %v484
    %v596 = vpack.c.b16 %v488, %v485
    %v597 = vpack.c.b16 %v489, %v486
    %v598 = vpack.c.b16 %v493, %v490
    %v599 = vpack.c.b16 %v494, %v491
    %v600 = vpack.c.b16 %v495, %v492
    %v601 = vpack.c.b16 %v499, %v496
    %v602 = vpack.c.b16 %v500, %v497
    %v603 = vpack.c.b16 %v501, %v498
    %v604 = vpack.c.b16 %v505, %v502
    %v605 = vpack.c.b16 %v506, %v503
    %v606 = vpack.c.b16 %v507, %v504
    %v607 = vpack.c.b16 %v511, %v508
    %v608 = vpack.c.b16 %v512, %v509
    %v609 = vpack.c.b16 %v513, %v510
    %v610 = vpack.c.b16 %v517, %v514
    %v611 = vpack.c.b16 %v518, %v515
    %v612 = vpack.c.b16 %v519, %v516
    %v613 = vpack.c.b16 %v523, %v520
    %v614 = vpack.c.b16 %v524, %v521
    %v615 = vpack.c.b16 %v525, %v522
    %v616 = vpack.c.b16 %v529, %v526
    %v617 = vpack.c.b16 %v530, %v527
    %v618 = vpack.c.b16 %v531, %v528
    %v619 = vpack.c.b16 %v535, %v532
    %v620 = vpack.c.b16 %v536, %v533
    %v621 = vpack.c.b16 %v537, %v534
    %v622 = vpack.c.b16 %v541, %v538
    %v623 = vpack.c.b16 %v542, %v539
    %v624 = vpack.c.b16 %v543, %v540
    %v625 = vpack.c.b16 %v547, %v544
    %v626 = vpack.c.b16 %v548, %v545
    %v627 = vpack.c.b16 %v549, %v546
    %v628 = vpack.c.b16 %v553, %v550
    %v629 = vpack.c.b16 %v554, %v551
    %v630 = vpack.c.b16 %v555, %v552
    %v631 = vpack.c.b16 %v559, %v556
    %v632 = vpack.c.b16 %v560, %v557
    %v633 = vpack.c.b16 %v561, %v558
    %706 = vmatpush.bf16.msra.mxu0 %v583
    %707 = vmatpush.bf16.msra.mxu0 %v580
    %708 = vmatpush.bf16.msra.mxu0 %v577
    %709 = vmatpush.bf16.msra.mxu0 %v574
    %710 = vmatpush.bf16.msra.mxu0 %v571
    %711 = vmatpush.bf16.msra.mxu0 %v568
    %712 = vmatpush.bf16.msra.mxu0 %v565
    %713 = vmatpush.bf16.msra.mxu0 %v562
    %714 = vmatmul.bf16.gmra.mxu0 %v311
    %v715 = vpop.f32.mrf.mxu0
    %v716 = vadd.f32 %v316, %v715
    %v717 = vpop.f32.mrf.mxu0
    %718 = vdwg.mxu0
    %719 = vmatpush.bf16.msra.mxu0 %v607
    %720 = vmatpush.bf16.msra.mxu0 %v604
    %721 = vmatpush.bf16.msra.mxu0 %v601
    %722 = vmatpush.bf16.msra.mxu0 %v598
    %723 = vmatpush.bf16.msra.mxu0 %v595
    %724 = vmatpush.bf16.msra.mxu0 %v592
    %725 = vmatpush.bf16.msra.mxu0 %v589
    %726 = vmatpush.bf16.msra.mxu0 %v586
    %727 = vmatmul.bf16.gmra.mxu0 %v312
    %v728 = vpop.f32.mrf.mxu0
    %v729 = vadd.f32 %v716, %v728
    %v730 = vpop.f32.mrf.mxu0
    %731 = vdwg.mxu0
    %732 = vmatpush.bf16.msra.mxu0 %v631
    %733 = vmatpush.bf16.msra.mxu0 %v628
    %734 = vmatpush.bf16.msra.mxu0 %v625
    %735 = vmatpush.bf16.msra.mxu0 %v622
    %736 = vmatpush.bf16.msra.mxu0 %v619
    %737 = vmatpush.bf16.msra.mxu0 %v616
    %738 = vmatpush.bf16.msra.mxu0 %v613
    %739 = vmatpush.bf16.msra.mxu0 %v610
    %740 = vmatmul.bf16.gmra.mxu0 %v313
    %v741 = vpop.f32.mrf.mxu0
    %v742 = vadd.f32 %v729, %v741
    %v743 = vpop.f32.mrf.mxu0
    %744 = vdwg.mxu0
    %745 = vmatpush.bf16.msra.mxu0 %v584
    %746 = vmatpush.bf16.msra.mxu0 %v581
    %747 = vmatpush.bf16.msra.mxu0 %v578
    %748 = vmatpush.bf16.msra.mxu0 %v575
    %749 = vmatpush.bf16.msra.mxu0 %v572
    %750 = vmatpush.bf16.msra.mxu0 %v569
    %751 = vmatpush.bf16.msra.mxu0 %v566
    %752 = vmatpush.bf16.msra.mxu0 %v563
    %753 = vmatmul.bf16.gmra.mxu0 %v311
    %v754 = vpop.f32.mrf.mxu0
    %v755 = vadd.f32 %v317, %v754
    %v756 = vpop.f32.mrf.mxu0
    %757 = vdwg.mxu0
    %758 = vmatpush.bf16.msra.mxu0 %v608
    %759 = vmatpush.bf16.msra.mxu0 %v605
    %760 = vmatpush.bf16.msra.mxu0 %v602
    %761 = vmatpush.bf16.msra.mxu0 %v599
    %762 = vmatpush.bf16.msra.mxu0 %v596
    %763 = vmatpush.bf16.msra.mxu0 %v593
    %764 = vmatpush.bf16.msra.mxu0 %v590
    %765 = vmatpush.bf16.msra.mxu0 %v587
    %766 = vmatmul.bf16.gmra.mxu0 %v312
    %v767 = vpop.f32.mrf.mxu0
    %v768 = vadd.f32 %v755, %v767
    %v769 = vpop.f32.mrf.mxu0
    %770 = vdwg.mxu0
    %771 = vmatpush.bf16.msra.mxu0 %v632
    %772 = vmatpush.bf16.msra.mxu0 %v629
    %773 = vmatpush.bf16.msra.mxu0 %v626
    %774 = vmatpush.bf16.msra.mxu0 %v623
    %775 = vmatpush.bf16.msra.mxu0 %v620
    %776 = vmatpush.bf16.msra.mxu0 %v617
    %777 = vmatpush.bf16.msra.mxu0 %v614
    %778 = vmatpush.bf16.msra.mxu0 %v611
    %779 = vmatmul.bf16.gmra.mxu0 %v313
    %v780 = vpop.f32.mrf.mxu0
    %v781 = vadd.f32 %v768, %v780
    %v782 = vpop.f32.mrf.mxu0
    %783 = vdwg.mxu0
    %784 = vmatpush.bf16.msra.mxu0 %v585
    %785 = vmatpush.bf16.msra.mxu0 %v582
    %786 = vmatpush.bf16.msra.mxu0 %v579
    %787 = vmatpush.bf16.msra.mxu0 %v576
    %788 = vmatpush.bf16.msra.mxu0 %v573
    %789 = vmatpush.bf16.msra.mxu0 %v570
    %790 = vmatpush.bf16.msra.mxu0 %v567
    %791 = vmatpush.bf16.msra.mxu0 %v564
    %792 = vmatmul.bf16.gmra.mxu0 %v311
    %v793 = vpop.f32.mrf.mxu0
    %v794 = vadd.f32 %v318, %v793
    %v795 = vpop.f32.mrf.mxu0
    %796 = vdwg.mxu0
    %797 = vmatpush.bf16.msra.mxu0 %v609
    %798 = vmatpush.bf16.msra.mxu0 %v606
    %799 = vmatpush.bf16.msra.mxu0 %v603
    %800 = vmatpush.bf16.msra.mxu0 %v600
    %801 = vmatpush.bf16.msra.mxu0 %v597
    %802 = vmatpush.bf16.msra.mxu0 %v594
    %803 = vmatpush.bf16.msra.mxu0 %v591
    %804 = vmatpush.bf16.msra.mxu0 %v588
    %805 = vmatmul.bf16.gmra.mxu0 %v312
    %v806 = vpop.f32.mrf.mxu0
    %v807 = vadd.f32 %v794, %v806
    %v808 = vpop.f32.mrf.mxu0
    %809 = vdwg.mxu0
    %810 = vmatpush.bf16.msra.mxu0 %v633
    %811 = vmatpush.bf16.msra.mxu0 %v630
    %812 = vmatpush.bf16.msra.mxu0 %v627
    %813 = vmatpush.bf16.msra.mxu0 %v624
    %814 = vmatpush.bf16.msra.mxu0 %v621
    %815 = vmatpush.bf16.msra.mxu0 %v618
    %816 = vmatpush.bf16.msra.mxu0 %v615
    %817 = vmatpush.bf16.msra.mxu0 %v612
    %818 = vmatmul.bf16.gmra.mxu0 %v313
    %v819 = vpop.f32.mrf.mxu0
    %v820 = vadd.f32 %v807, %v819
    %v821 = vpop.f32.mrf.mxu0
    %822 = vdwg.mxu0
    %v823 = vmax.f32 %v742, 0.0
    %v824 = vmax.f32 %v781, 0.0
    %v825 = vmax.f32 %v820, 0.0
    %v826 = vld [vmem:[#allocation10] sm:$0xf]
    %v827 = vld [vmem:[#allocation10 + $0x4] sm:$0xf]
    %v828 = vld [vmem:[#allocation10 + $0x8] sm:$0xf]
    %v829 = vld [vmem:[#allocation10 + $0xc] sm:$0xf]
    %v830 = vld [vmem:[#allocation10 + $0x10] sm:$0xf]
    %v831 = vld [vmem:[#allocation10 + $0x14] sm:$0xf]
    %v832 = vld [vmem:[#allocation10 + $0x18] sm:$0xf]
    %v833 = vld [vmem:[#allocation10 + $0x1c] sm:$0xf]
    %v834 = vld [vmem:[#allocation10 + $0x20] sm:$0xf]
    %v835 = vld [vmem:[#allocation10 + $0x24] sm:$0xf]
    %v836 = vld [vmem:[#allocation10 + $0x28] sm:$0xf]
    %v837 = vld [vmem:[#allocation10 + $0x2c] sm:$0xf]
    %v838 = vld [vmem:[#allocation10 + $0x30] sm:$0xf]
    %v839 = vld [vmem:[#allocation10 + $0x34] sm:$0xf]
    %v840 = vld [vmem:[#allocation10 + $0x38] sm:$0xf]
    %v841 = vld [vmem:[#allocation10 + $0x3c] sm:$0xf]
    %v842 = vld [vmem:[#allocation10 + $0x40] sm:$0xf]
    %v843 = vld [vmem:[#allocation10 + $0x44] sm:$0xf]
    %v844 = vld [vmem:[#allocation10 + $0x48] sm:$0xf]
    %v845 = vld [vmem:[#allocation10 + $0x4c] sm:$0xf]
    %v846 = vld [vmem:[#allocation10 + $0x50] sm:$0xf]
    %v847 = vld [vmem:[#allocation10 + $0x54] sm:$0xf]
    %v848 = vld [vmem:[#allocation10 + $0x58] sm:$0xf]
    %v849 = vld [vmem:[#allocation10 + $0x5c] sm:$0xf]
    %v850 = vld [vmem:[#allocation10 + $0x60] sm:$0xf]
    %v851 = vld [vmem:[#allocation10 + $0x64] sm:$0xf]
    %v852 = vld [vmem:[#allocation10 + $0x68] sm:$0xf]
    %v853 = vld [vmem:[#allocation10 + $0x6c] sm:$0xf]
    %v854 = vld [vmem:[#allocation10 + $0x70] sm:$0xf]
    %v855 = vld [vmem:[#allocation10 + $0x74] sm:$0xf]
    %v856 = vld [vmem:[#allocation10 + $0x78] sm:$0xf]
    %v857 = vld [vmem:[#allocation10 + $0x7c] sm:$0xf]
    %v858 = vld [vmem:[#allocation10 + $0x80] sm:$0xf]
    %v859 = vld [vmem:[#allocation10 + $0x84] sm:$0xf]
    %v860 = vld [vmem:[#allocation10 + $0x88] sm:$0xf]
    %v861 = vld [vmem:[#allocation10 + $0x8c] sm:$0xf]
    %v862 = vld [vmem:[#allocation10 + $0x90] sm:$0xf]
    %v863 = vld [vmem:[#allocation10 + $0x94] sm:$0xf]
    %v864 = vld [vmem:[#allocation10 + $0x98] sm:$0xf]
    %v865 = vld [vmem:[#allocation10 + $0x9c] sm:$0xf]
    %v866 = vld [vmem:[#allocation10 + $0xa0] sm:$0xf]
    %v867 = vld [vmem:[#allocation10 + $0xa4] sm:$0xf]
    %v868 = vld [vmem:[#allocation10 + $0xa8] sm:$0xf]
    %v869 = vld [vmem:[#allocation10 + $0xac] sm:$0xf]
    %v870 = vld [vmem:[#allocation10 + $0xb0] sm:$0xf]
    %v871 = vld [vmem:[#allocation10 + $0xb4] sm:$0xf]
    %v872 = vld [vmem:[#allocation10 + $0xb8] sm:$0xf]
    %v873 = vld [vmem:[#allocation10 + $0xbc] sm:$0xf]
    %v874 = vpack.c.bf16 %v823, %v823
    %v875 = vpack.c.bf16 %v824, %v824
    %v876 = vpack.c.bf16 %v825, %v825
    %v877 = vld [vmem:[%s7] sm:$0x1]
    %v879 = vperm.slane %v877, 0
    %v929 = vunpack.c.l.b16 %v826
    %v930 = vunpack.c.l.b16 %v827
    %v931 = vunpack.c.l.b16 %v828
    %v932 = vunpack.c.l.b16 %v829
    %v933 = vunpack.c.l.b16 %v830
    %v934 = vunpack.c.l.b16 %v831
    %v935 = vunpack.c.l.b16 %v832
    %v936 = vunpack.c.l.b16 %v833
    %v937 = vunpack.c.l.b16 %v834
    %v938 = vunpack.c.l.b16 %v835
    %v939 = vunpack.c.l.b16 %v836
    %v940 = vunpack.c.l.b16 %v837
    %v941 = vunpack.c.l.b16 %v838
    %v942 = vunpack.c.l.b16 %v839
    %v943 = vunpack.c.l.b16 %v840
    %v944 = vunpack.c.l.b16 %v841
    %v945 = vunpack.c.l.b16 %v842
    %v946 = vunpack.c.l.b16 %v843
    %v947 = vunpack.c.l.b16 %v844
    %v948 = vunpack.c.l.b16 %v845
    %v949 = vunpack.c.l.b16 %v846
    %v950 = vunpack.c.l.b16 %v847
    %v951 = vunpack.c.l.b16 %v848
    %v952 = vunpack.c.l.b16 %v849
    %v953 = vunpack.c.l.b16 %v850
    %v954 = vunpack.c.l.b16 %v851
    %v955 = vunpack.c.l.b16 %v852
    %v956 = vunpack.c.l.b16 %v853
    %v957 = vunpack.c.l.b16 %v854
    %v958 = vunpack.c.l.b16 %v855
    %v959 = vunpack.c.l.b16 %v856
    %v960 = vunpack.c.l.b16 %v857
    %v961 = vunpack.c.l.b16 %v858
    %v962 = vunpack.c.l.b16 %v859
    %v963 = vunpack.c.l.b16 %v860
    %v964 = vunpack.c.l.b16 %v861
    %v965 = vunpack.c.l.b16 %v862
    %v966 = vunpack.c.l.b16 %v863
    %v967 = vunpack.c.l.b16 %v864
    %v968 = vunpack.c.l.b16 %v865
    %v969 = vunpack.c.l.b16 %v866
    %v970 = vunpack.c.l.b16 %v867
    %v971 = vunpack.c.l.b16 %v868
    %v972 = vunpack.c.l.b16 %v869
    %v973 = vunpack.c.l.b16 %v870
    %v974 = vunpack.c.l.b16 %v871
    %v975 = vunpack.c.l.b16 %v872
    %v976 = vunpack.c.l.b16 %v873
    %v977 = vpack.c.b16 %v930, %v929
    %v978 = vpack.c.b16 %v932, %v931
    %v979 = vpack.c.b16 %v934, %v933
    %v980 = vpack.c.b16 %v936, %v935
    %v981 = vpack.c.b16 %v938, %v937
    %v982 = vpack.c.b16 %v940, %v939
    %v983 = vpack.c.b16 %v942, %v941
    %v984 = vpack.c.b16 %v944, %v943
    %v985 = vpack.c.b16 %v946, %v945
    %v986 = vpack.c.b16 %v948, %v947
    %v987 = vpack.c.b16 %v950, %v949
    %v988 = vpack.c.b16 %v952, %v951
    %v989 = vpack.c.b16 %v954, %v953
    %v990 = vpack.c.b16 %v956, %v955
    %v991 = vpack.c.b16 %v958, %v957
    %v992 = vpack.c.b16 %v960, %v959
    %v993 = vpack.c.b16 %v962, %v961
    %v994 = vpack.c.b16 %v964, %v963
    %v995 = vpack.c.b16 %v966, %v965
    %v996 = vpack.c.b16 %v968, %v967
    %v997 = vpack.c.b16 %v970, %v969
    %v998 = vpack.c.b16 %v972, %v971
    %v999 = vpack.c.b16 %v974, %v973
    %v1000 = vpack.c.b16 %v976, %v975
    %1025 = vmatpush.bf16.msra.mxu0 %v984
    %1026 = vmatpush.bf16.msra.mxu0 %v983
    %1027 = vmatpush.bf16.msra.mxu0 %v982
    %1028 = vmatpush.bf16.msra.mxu0 %v981
    %1029 = vmatpush.bf16.msra.mxu0 %v980
    %1030 = vmatpush.bf16.msra.mxu0 %v979
    %1031 = vmatpush.bf16.msra.mxu0 %v978
    %1032 = vmatpush.bf16.msra.mxu0 %v977
    %1033 = vmatmul.bf16.gmra.mxu0 %v874
    %v1034 = vpop.f32.mrf.mxu0
    %v1035 = vadd.f32 %v879, %v1034
    %v1036 = vpop.f32.mrf.mxu0
    %1037 = vdwg.mxu0
    %1038 = vmatpush.bf16.msra.mxu0 %v992
    %1039 = vmatpush.bf16.msra.mxu0 %v991
    %1040 = vmatpush.bf16.msra.mxu0 %v990
    %1041 = vmatpush.bf16.msra.mxu0 %v989
    %1042 = vmatpush.bf16.msra.mxu0 %v988
    %1043 = vmatpush.bf16.msra.mxu0 %v987
    %1044 = vmatpush.bf16.msra.mxu0 %v986
    %1045 = vmatpush.bf16.msra.mxu0 %v985
    %1046 = vmatmul.bf16.gmra.mxu0 %v875
    %v1047 = vpop.f32.mrf.mxu0
    %v1048 = vadd.f32 %v1035, %v1047
    %v1049 = vpop.f32.mrf.mxu0
    %1050 = vdwg.mxu0
    %1051 = vmatpush.bf16.msra.mxu0 %v1000
    %1052 = vmatpush.bf16.msra.mxu0 %v999
    %1053 = vmatpush.bf16.msra.mxu0 %v998
    %1054 = vmatpush.bf16.msra.mxu0 %v997
    %1055 = vmatpush.bf16.msra.mxu0 %v996
    %1056 = vmatpush.bf16.msra.mxu0 %v995
    %1057 = vmatpush.bf16.msra.mxu0 %v994
    %1058 = vmatpush.bf16.msra.mxu0 %v993
    %1059 = vmatmul.bf16.gmra.mxu0 %v876
    %v1060 = vpop.f32.mrf.mxu0
    %v1061 = vadd.f32 %v1048, %v1060
    %v1062 = vpop.f32.mrf.mxu0
    %1063 = vdwg.mxu0
    %v1064 = vld [vmem:[#allocation5] sm:$0x1]
    %vm1065 = vcmp.gt.f32.partialorder %v1064, 0.5
    %v1066 = vtanh.pop %v1061
    %v1067 = vsel %vm1065, 1, 0
    %v1068 = vperm.slane %v1067, 0
    %vm1069 = vcmp.eq.s32.totalorder %v1068, 1
    %v1070 = vsel %vm1069, %v1066, %v1061
    %1071 = vst [vmem:[#allocation13] sm:$0xff] %v1070
    // Predicated region
    $region58: #{tpu_custom_call.1} parent=1 // pred_check
      _
    $region59: #{tpu_custom_call.1} parent=1 // pred_check_branch
      %1073 = sbr.rel (0) target = $region61
    $region60: #{tpu_custom_call.1} parent=1 // pred_region
      %1075 = vsyncadd [#allocation4], 0
      %s1077 = sshll.u32 [#allocation13], 4
      %s1078 = int_to_ptr.vmem [resolvable:$true] %s1077
      %s1079 = sshll.u32 %s8, 4
      %s1080 = int_to_ptr.hbm [resolvable:$true] %s1079
      %1082 = dma.vmem_to_hbm [thread:$0]  %s1078, 128, %s1080, [#allocation4]
    $region61: #{tpu_custom_call.1} parent=1 // pred_fallthru
      _
    // Predicated region
    $region62: #{tpu_custom_call.1} parent=1 // pred_check
      _
    $region63: #{tpu_custom_call.1} parent=1 // pred_check_branch
      %1084 = sbr.rel (0) target = $region65
    $region64: #{tpu_custom_call.1} parent=1 // pred_region
      %1086 = dma.done [#allocation4], 128
    $region65: #{tpu_custom_call.1} parent=1 // pred_fallthru
      _
    %1087 = vsyncpa [#allocation3], 1
    %1088 = vsyncpa [#allocation6], 1
    %1089 = vsyncpa [#allocation9], 1
    %1090 = vsyncpa [#allocation12], 1
    %1091 = vsyncpa [#allocation4], 1

// kernel: tpu_custom_call.1
$region0: #{tpu_custom_call.1}
  #allocation0 [shape = 'u32[]', space=smem, size = 0x4, offset = 0x4, fixed_abs, tag = 'smem constant byte address 0x4 - core index']
  #allocation1 [shape = 'u32[72,128]{1,0:T(1,128)}', space=vmem, size = 0x9000, scoped, tag = 'internal scratch']
  %s0 = inlined_call_operand.hbm [shape: f32[7,32], index: 0, kind: input, shape index: {}]
  %s1 = inlined_call_operand.hbm [shape: f32[1,128], index: 1, kind: input, shape index: {}]
  %s2 = inlined_call_operand.hbm [shape: bf16[32,384], index: 2, kind: input, shape index: {}]
  %s3 = inlined_call_operand.hbm [shape: bf16[384,384], index: 3, kind: input, shape index: {}]
  %s4 = inlined_call_operand.hbm [shape: bf16[384,128], index: 4, kind: input, shape index: {}]
  %s5 = inlined_call_operand.vmem [shape: f32[1,384], index: 5, kind: input, shape index: {}]
  %s6 = inlined_call_operand.hbm [shape: f32[1,384], index: 6, kind: input, shape index: {}]
  %s7 = inlined_call_operand.vmem [shape: f32[1,128], index: 7, kind: input, shape index: {}]
  %s8 = inlined_call_operand.hbm [shape: f32[7,128], index: 8, kind: output, shape index: {}]
  %s9 = sld [smem:[#allocation0]]
  $region66: #{tpu_custom_call.1} parent=0
    _
  %s11 = ssub.s32 1, %s9
  %s12 = scalar_select 0, %s11, %s9
  $region1: #{tpu_custom_call.1} parent=0
    #allocation2 [shape = 'u8[4096]{0}', space=vmem, size = 0x1000, scoped, tag = 'input window, operand 0, single buffered']
    #allocation3 [shape = 's32[1]{0}', space=sflag, size = 0x4, scoped, tag = 'scoped memory for tpu_custom_call.1']
    #allocation4 [shape = 's32[1]{0}', space=sflag, size = 0x4, scoped, tag = 'scoped memory for tpu_custom_call.1']
    #allocation5 [shape = 'u8[512]{0}', space=vmem, size = 0x400, scoped, tag = 'input window, operand 1, single buffered']
    #allocation6 [shape = 's32[1]{0}', space=sflag, size = 0x4, scoped, tag = 'scoped memory for tpu_custom_call.1']
    #allocation7 [shape = 'u8[24576]{0}', space=vmem, size = 0x6000, scoped, tag = 'input window, operand 2, single buffered']
    #allocation8 [shape = 'u8[294912]{0}', space=vmem, size = 0x48000, scoped, tag = 'input window, operand 3, single buffered']
    #allocation9 [shape = 's32[1]{0}', space=sflag, size = 0x4, scoped, tag = 'scoped memory for tpu_custom_call.1']
    #allocation10 [shape = 'u8[98304]{0}', space=vmem, size = 0x18000, scoped, tag = 'input window, operand 4, single buffered']
    #allocation11 [shape = 'u8[1536]{0}', space=vmem, size = 0x800, scoped, tag = 'input window, operand 6, single buffered']
    #allocation12 [shape = 's32[1]{0}', space=sflag, size = 0x4, scoped, tag = 'scoped memory for tpu_custom_call.1']
    #allocation13 [shape = 'u8[4096]{0}', space=vmem, size = 0x1000, scoped, tag = 'output window, operand 0, single buffered']
    %13 = vsyncpa [#allocation3], 0
    %14 = vsyncpa [#allocation6], 0
    %15 = vsyncpa [#allocation9], 0
    %16 = vsyncpa [#allocation12], 0
    %17 = vsyncpa [#allocation4], 0
    // Predicated region
    $region2: #{tpu_custom_call.1} parent=1 // pred_check
      _
    $region3: #{tpu_custom_call.1} parent=1 // pred_check_branch
      %19 = sbr.rel (0) target = $region5
    $region4: #{tpu_custom_call.1} parent=1 // pred_region
      %21 = vsyncadd [#allocation3], 0
      %s23 = sshll.u32 %s0, 4
      %s24 = int_to_ptr.hbm [resolvable:$true] %s23
      %s25 = sshll.u32 [#allocation2], 4
      %s26 = int_to_ptr.vmem [resolvable:$true] %s25
      %28 = dma.hbm_to_vmem [thread:$0]  %s24, 128, %s26, [#allocation3]
    $region5: #{tpu_custom_call.1} parent=1 // pred_fallthru
      _
    // Predicated region
    $region6: #{tpu_custom_call.1} parent=1 // pred_check
      _
    $region7: #{tpu_custom_call.1} parent=1 // pred_check_branch
      %30 = sbr.rel (0) target = $region9
    $region8: #{tpu_custom_call.1} parent=1 // pred_region
      %32 = vsyncadd [#allocation6], 0
      %s34 = sshll.u32 %s1, 4
      %s35 = int_to_ptr.hbm [resolvable:$true] %s34
      %s36 = sshll.u32 [#allocation5], 4
      %s37 = int_to_ptr.vmem [resolvable:$true] %s36
      %39 = dma.hbm_to_vmem [thread:$0]  %s35, 16, %s37, [#allocation6]
    $region9: #{tpu_custom_call.1} parent=1 // pred_fallthru
      _
    // Predicated region
    $region10: #{tpu_custom_call.1} parent=1 // pred_check
      _
    $region11: #{tpu_custom_call.1} parent=1 // pred_check_branch
      %41 = sbr.rel (0) target = $region13
    $region12: #{tpu_custom_call.1} parent=1 // pred_region
      %43 = vsyncadd [#allocation6], 0
      %s44 = sshll.u32 %s2, 4
      %s45 = int_to_ptr.hbm [resolvable:$true] %s44
      %s46 = sshll.u32 [#allocation7], 4
      %s47 = int_to_ptr.vmem [resolvable:$true] %s46
      %52 = dma.hbm_to_vmem [thread:$0]  %s45, 768, %s47, [#allocation6], 192, 192, 12
    $region13: #{tpu_custom_call.1} parent=1 // pred_fallthru
      _
    // Predicated region
    $region14: #{tpu_custom_call.1} parent=1 // pred_check
      _
    $region15: #{tpu_custom_call.1} parent=1 // pred_check_branch
      %54 = sbr.rel (0) target = $region17
    $region16: #{tpu_custom_call.1} parent=1 // pred_region
      %56 = vsyncadd [#allocation9], 0
      %s57 = sshll.u32 %s3, 4
      %s58 = int_to_ptr.hbm [resolvable:$true] %s57
      %s59 = sshll.u32 [#allocation8], 4
      %s60 = int_to_ptr.vmem [resolvable:$true] %s59
      %65 = dma.hbm_to_vmem [thread:$0]  %s58, 9216, %s60, [#allocation9], 192, 192, 12
    $region17: #{tpu_custom_call.1} parent=1 // pred_fallthru
      _
    // Predicated region
    $region18: #{tpu_custom_call.1} parent=1 // pred_check
      _
    $region19: #{tpu_custom_call.1} parent=1 // pred_check_branch
      %67 = sbr.rel (0) target = $region21
    $region20: #{tpu_custom_call.1} parent=1 // pred_region
      %69 = vsyncadd [#allocation9], 0
      %s70 = sshll.u32 %s4, 4
      %s71 = int_to_ptr.hbm [resolvable:$true] %s70
      %s72 = sshll.u32 [#allocation10], 4
      %s73 = int_to_ptr.vmem [resolvable:$true] %s72
      %78 = dma.hbm_to_vmem [thread:$0]  %s71, 3072, %s73, [#allocation9], 64, 64, 4
    $region21: #{tpu_custom_call.1} parent=1 // pred_fallthru
      _
    // Predicated region
    $region22: #{tpu_custom_call.1} parent=1 // pred_check
      _
    $region23: #{tpu_custom_call.1} parent=1 // pred_check_branch
      %80 = sbr.rel (0) target = $region25
    $region24: #{tpu_custom_call.1} parent=1 // pred_region
      _
    $region25: #{tpu_custom_call.1} parent=1 // pred_fallthru
      _
    // Predicated region
    $region26: #{tpu_custom_call.1} parent=1 // pred_check
      _
    $region27: #{tpu_custom_call.1} parent=1 // pred_check_branch
      %82 = sbr.rel (0) target = $region29
    $region28: #{tpu_custom_call.1} parent=1 // pred_region
      %84 = vsyncadd [#allocation12], 0
      %s86 = sshll.u32 %s6, 4
      %s87 = int_to_ptr.hbm [resolvable:$true] %s86
      %s88 = sshll.u32 [#allocation11], 4
      %s89 = int_to_ptr.vmem [resolvable:$true] %s88
      %91 = dma.hbm_to_vmem [thread:$0]  %s87, 48, %s89, [#allocation12]
    $region29: #{tpu_custom_call.1} parent=1 // pred_fallthru
      _
    // Predicated region
    $region30: #{tpu_custom_call.1} parent=1 // pred_check
      _
    $region31: #{tpu_custom_call.1} parent=1 // pred_check_branch
      %93 = sbr.rel (0) target = $region33
    $region32: #{tpu_custom_call.1} parent=1 // pred_region
      _
    $region33: #{tpu_custom_call.1} parent=1 // pred_fallthru
      _
    // Predicated region
    $region34: #{tpu_custom_call.1} parent=1 // pred_check
      _
    $region35: #{tpu_custom_call.1} parent=1 // pred_check_branch
      %95 = sbr.rel (0) target = $region37
    $region36: #{tpu_custom_call.1} parent=1 // pred_region
      %97 = dma.done [#allocation3], 128
    $region37: #{tpu_custom_call.1} parent=1 // pred_fallthru
      _
    // Predicated region
    $region38: #{tpu_custom_call.1} parent=1 // pred_check
      _
    $region39: #{tpu_custom_call.1} parent=1 // pred_check_branch
      %99 = sbr.rel (0) target = $region41
    $region40: #{tpu_custom_call.1} parent=1 // pred_region
      %101 = dma.done [#allocation6], 16
    $region41: #{tpu_custom_call.1} parent=1 // pred_fallthru
      _
    // Predicated region
    $region42: #{tpu_custom_call.1} parent=1 // pred_check
      _
    $region43: #{tpu_custom_call.1} parent=1 // pred_check_branch
      %103 = sbr.rel (0) target = $region45
    $region44: #{tpu_custom_call.1} parent=1 // pred_region
      %105 = dma.done [#allocation6], 768
    $region45: #{tpu_custom_call.1} parent=1 // pred_fallthru
      _
    // Predicated region
    $region46: #{tpu_custom_call.1} parent=1 // pred_check
      _
    $region47: #{tpu_custom_call.1} parent=1 // pred_check_branch
      %107 = sbr.rel (0) target = $region49
    $region48: #{tpu_custom_call.1} parent=1 // pred_region
      %109 = dma.done [#allocation9], 9216
    $region49: #{tpu_custom_call.1} parent=1 // pred_fallthru
      _
    // Predicated region
    $region50: #{tpu_custom_call.1} parent=1 // pred_check
      _
    $region51: #{tpu_custom_call.1} parent=1 // pred_check_branch
      %111 = sbr.rel (0) target = $region53
    $region52: #{tpu_custom_call.1} parent=1 // pred_region
      %113 = dma.done [#allocation9], 3072
    $region53: #{tpu_custom_call.1} parent=1 // pred_fallthru
      _
    // Predicated region
    $region54: #{tpu_custom_call.1} parent=1 // pred_check
      _
    $region55: #{tpu_custom_call.1} parent=1 // pred_check_branch
      %115 = sbr.rel (0) target = $region57
    $region56: #{tpu_custom_call.1} parent=1 // pred_region
      %117 = dma.done [#allocation12], 48
    $region57: #{tpu_custom_call.1} parent=1 // pred_fallthru
      _
    %v119 = vld [vmem:[#allocation2] sm:$0xff]
    %v120 = vld [vmem:[#allocation7] sm:$0xff]
    %v121 = vld [vmem:[#allocation7 + $0x8] sm:$0xf]
    %v122 = vld [vmem:[#allocation7 + $0xc] sm:$0xff]
    %v123 = vld [vmem:[#allocation7 + $0x14] sm:$0xf]
    %v124 = vld [vmem:[#allocation7 + $0x18] sm:$0xff]
    %v125 = vld [vmem:[#allocation7 + $0x20] sm:$0xf]
    %v126 = vld [vmem:[#allocation7 + $0x24] sm:$0xff]
    %v127 = vld [vmem:[#allocation7 + $0x2c] sm:$0xf]
    %v128 = vpack.c.bf16 %v119, %v119
    %v129 = vld [vmem:[%s5] sm:$0x7]
    %v131 = vperm.slane %v129, 0
    %v132 = vperm.slane %v129, 1
    %v133 = vperm.slane %v129, 2
    %v145 = vunpack.c.l.b16 %v120
    %v146 = vunpack.c.h.b16 %v120
    %v147 = vunpack.c.l.b16 %v121
    %v148 = vunpack.c.l.b16 %v122
    %v149 = vunpack.c.h.b16 %v122
    %v150 = vunpack.c.l.b16 %v123
    %v151 = vunpack.c.l.b16 %v124
    %v152 = vunpack.c.h.b16 %v124
    %v153 = vunpack.c.l.b16 %v125
    %v154 = vunpack.c.l.b16 %v126
    %v155 = vunpack.c.h.b16 %v126
    %v156 = vunpack.c.l.b16 %v127
    %v157 = vpack.c.b16 %v148, %v145
    %v158 = vpack.c.b16 %v149, %v146
    %v159 = vpack.c.b16 %v150, %v147
    %v160 = vpack.c.b16 %v154, %v151
    %v161 = vpack.c.b16 %v155, %v152
    %v162 = vpack.c.b16 %v156, %v153
    %vm169 = vcmask 261120
    %v171 = vsel %vm169, %v128, 0
    %173 = vmatpush.bf16.msra.mxu0 0
    %174 = vmatpush.bf16.msra.mxu0 0
    %175 = vmatpush.bf16.msra.mxu0 0
    %176 = vmatpush.bf16.msra.mxu0 0
    %177 = vmatpush.bf16.msra.mxu0 0
    %178 = vmatpush.bf16.msra.mxu0 0
    %179 = vmatpush.bf16.msra.mxu0 %v160
    %180 = vmatpush.bf16.msra.mxu0 %v157
    %181 = vmatmul.bf16.gmra.mxu0 %v171
    %v182 = vpop.f32.mrf.mxu0
    %v183 = vadd.f32 %v131, %v182
    %v184 = vpop.f32.mrf.mxu0
    %185 = vdwg.mxu0
    %186 = vmatpush.bf16.msra.mxu0 0
    %187 = vmatpush.bf16.msra.mxu0 0
    %188 = vmatpush.bf16.msra.mxu0 0
    %189 = vmatpush.bf16.msra.mxu0 0
    %190 = vmatpush.bf16.msra.mxu0 0
    %191 = vmatpush.bf16.msra.mxu0 0
    %192 = vmatpush.bf16.msra.mxu0 %v161
    %193 = vmatpush.bf16.msra.mxu0 %v158
    %194 = vmatmul.bf16.gmra.mxu0 %v171
    %v195 = vpop.f32.mrf.mxu0
    %v196 = vadd.f32 %v132, %v195
    %v197 = vpop.f32.mrf.mxu0
    %198 = vdwg.mxu0
    %199 = vmatpush.bf16.msra.mxu0 0
    %200 = vmatpush.bf16.msra.mxu0 0
    %201 = vmatpush.bf16.msra.mxu0 0
    %202 = vmatpush.bf16.msra.mxu0 0
    %203 = vmatpush.bf16.msra.mxu0 0
    %204 = vmatpush.bf16.msra.mxu0 0
    %205 = vmatpush.bf16.msra.mxu0 %v162
    %206 = vmatpush.bf16.msra.mxu0 %v159
    %207 = vmatmul.bf16.gmra.mxu0 %v171
    %v208 = vpop.f32.mrf.mxu0
    %v209 = vadd.f32 %v133, %v208
    %v210 = vpop.f32.mrf.mxu0
    %211 = vdwg.mxu0
    %v212 = vmax.f32 %v183, 0.0
    %v213 = vmax.f32 %v196, 0.0
    %v214 = vmax.f32 %v209, 0.0
    %v215 = vld [vmem:[#allocation8] sm:$0xff]
    %v216 = vld [vmem:[#allocation8 + $0x8] sm:$0xf]
    %v217 = vld [vmem:[#allocation8 + $0xc] sm:$0xff]
    %v218 = vld [vmem:[#allocation8 + $0x14] sm:$0xf]
    %v219 = vld [vmem:[#allocation8 + $0x18] sm:$0xff]
    %v220 = vld [vmem:[#allocation8 + $0x20] sm:$0xf]
    %v221 = vld [vmem:[#allocation8 + $0x24] sm:$0xff]
    %v222 = vld [vmem:[#allocation8 + $0x2c] sm:$0xf]
    %v223 = vld [vmem:[#allocation8 + $0x30] sm:$0xff]
    %v224 = vld [vmem:[#allocation8 + $0x38] sm:$0xf]
    %v225 = vld [vmem:[#allocation8 + $0x3c] sm:$0xff]
    %v226 = vld [vmem:[#allocation8 + $0x44] sm:$0xf]
    %v227 = vld [vmem:[#allocation8 + $0x48] sm:$0xff]
    %v228 = vld [vmem:[#allocation8 + $0x50] sm:$0xf]
    %v229 = vld [vmem:[#allocation8 + $0x54] sm:$0xff]
    %v230 = vld [vmem:[#allocation8 + $0x5c] sm:$0xf]
    %v231 = vld [vmem:[#allocation8 + $0x60] sm:$0xff]
    %v232 = vld [vmem:[#allocation8 + $0x68] sm:$0xf]
    %v233 = vld [vmem:[#allocation8 + $0x6c] sm:$0xff]
    %v234 = vld [vmem:[#allocation8 + $0x74] sm:$0xf]
    %v235 = vld [vmem:[#allocation8 + $0x78] sm:$0xff]
    %v236 = vld [vmem:[#allocation8 + $0x80] sm:$0xf]
    %v237 = vld [vmem:[#allocation8 + $0x84] sm:$0xff]
    %v238 = vld [vmem:[#allocation8 + $0x8c] sm:$0xf]
    %v239 = vld [vmem:[#allocation8 + $0x90] sm:$0xff]
    %v240 = vld [vmem:[#allocation8 + $0x98] sm:$0xf]
    %v241 = vld [vmem:[#allocation8 + $0x9c] sm:$0xff]
    %v242 = vld [vmem:[#allocation8 + $0xa4] sm:$0xf]
    %v243 = vld [vmem:[#allocation8 + $0xa8] sm:$0xff]
    %v244 = vld [vmem:[#allocation8 + $0xb0] sm:$0xf]
    %v245 = vld [vmem:[#allocation8 + $0xb4] sm:$0xff]
    %v246 = vld [vmem:[#allocation8 + $0xbc] sm:$0xf]
    %v247 = vld [vmem:[#allocation8 + $0xc0] sm:$0xff]
    %v248 = vld [vmem:[#allocation8 + $0xc8] sm:$0xf]
    %v249 = vld [vmem:[#allocation8 + $0xcc] sm:$0xff]
    %v250 = vld [vmem:[#allocation8 + $0xd4] sm:$0xf]
    %v251 = vld [vmem:[#allocation8 + $0xd8] sm:$0xff]
    %v252 = vld [vmem:[#allocation8 + $0xe0] sm:$0xf]
    %v253 = vld [vmem:[#allocation8 + $0xe4] sm:$0xff]
    %v254 = vld [vmem:[#allocation8 + $0xec] sm:$0xf]
    %v255 = vld [vmem:[#allocation8 + $0xf0] sm:$0xff]
    %v256 = vld [vmem:[#allocation8 + $0xf8] sm:$0xf]
    %v257 = vld [vmem:[#allocation8 + $0xfc] sm:$0xff]
    %v258 = vld [vmem:[#allocation8 + $0x104] sm:$0xf]
    %v259 = vld [vmem:[#allocation8 + $0x108] sm:$0xff]
    %v260 = vld [vmem:[#allocation8 + $0x110] sm:$0xf]
    %v261 = vld [vmem:[#allocation8 + $0x114] sm:$0xff]
    %v262 = vld [vmem:[#allocation8 + $0x11c] sm:$0xf]
    %v263 = vld [vmem:[#allocation8 + $0x120] sm:$0xff]
    %v264 = vld [vmem:[#allocation8 + $0x128] sm:$0xf]
    %v265 = vld [vmem:[#allocation8 + $0x12c] sm:$0xff]
    %v266 = vld [vmem:[#allocation8 + $0x134] sm:$0xf]
    %v267 = vld [vmem:[#allocation8 + $0x138] sm:$0xff]
    %v268 = vld [vmem:[#allocation8 + $0x140] sm:$0xf]
    %v269 = vld [vmem:[#allocation8 + $0x144] sm:$0xff]
    %v270 = vld [vmem:[#allocation8 + $0x14c] sm:$0xf]
    %v271 = vld [vmem:[#allocation8 + $0x150] sm:$0xff]
    %v272 = vld [vmem:[#allocation8 + $0x158] sm:$0xf]
    %v273 = vld [vmem:[#allocation8 + $0x15c] sm:$0xff]
    %v274 = vld [vmem:[#allocation8 + $0x164] sm:$0xf]
    %v275 = vld [vmem:[#allocation8 + $0x168] sm:$0xff]
    %v276 = vld [vmem:[#allocation8 + $0x170] sm:$0xf]
    %v277 = vld [vmem:[#allocation8 + $0x174] sm:$0xff]
    %v278 = vld [vmem:[#allocation8 + $0x17c] sm:$0xf]
    %v279 = vld [vmem:[#allocation8 + $0x180] sm:$0xff]
    %v280 = vld [vmem:[#allocation8 + $0x188] sm:$0xf]
    %v281 = vld [vmem:[#allocation8 + $0x18c] sm:$0xff]
    %v282 = vld [vmem:[#allocation8 + $0x194] sm:$0xf]
    %v283 = vld [vmem:[#allocation8 + $0x198] sm:$0xff]
    %v284 = vld [vmem:[#allocation8 + $0x1a0] sm:$0xf]
    %v285 = vld [vmem:[#allocation8 + $0x1a4] sm:$0xff]
    %v286 = vld [vmem:[#allocation8 + $0x1ac] sm:$0xf]
    %v287 = vld [vmem:[#allocation8 + $0x1b0] sm:$0xff]
    %v288 = vld [vmem:[#allocation8 + $0x1b8] sm:$0xf]
    %v289 = vld [vmem:[#allocation8 + $0x1bc] sm:$0xff]
    %v290 = vld [vmem:[#allocation8 + $0x1c4] sm:$0xf]
    %v291 = vld [vmem:[#allocation8 + $0x1c8] sm:$0xff]
    %v292 = vld [vmem:[#allocation8 + $0x1d0] sm:$0xf]
    %v293 = vld [vmem:[#allocation8 + $0x1d4] sm:$0xff]
    %v294 = vld [vmem:[#allocation8 + $0x1dc] sm:$0xf]
    %v295 = vld [vmem:[#allocation8 + $0x1e0] sm:$0xff]
    %v296 = vld [vmem:[#allocation8 + $0x1e8] sm:$0xf]
    %v297 = vld [vmem:[#allocation8 + $0x1ec] sm:$0xff]
    %v298 = vld [vmem:[#allocation8 + $0x1f4] sm:$0xf]
    %v299 = vld [vmem:[#allocation8 + $0x1f8] sm:$0xff]
    %v300 = vld [vmem:[#allocation8 + $0x200] sm:$0xf]
    %v301 = vld [vmem:[#allocation8 + $0x204] sm:$0xff]
    %v302 = vld [vmem:[#allocation8 + $0x20c] sm:$0xf]
    %v303 = vld [vmem:[#allocation8 + $0x210] sm:$0xff]
    %v304 = vld [vmem:[#allocation8 + $0x218] sm:$0xf]
    %v305 = vld [vmem:[#allocation8 + $0x21c] sm:$0xff]
    %v306 = vld [vmem:[#allocation8 + $0x224] sm:$0xf]
    %v307 = vld [vmem:[#allocation8 + $0x228] sm:$0xff]
    %v308 = vld [vmem:[#allocation8 + $0x230] sm:$0xf]
    %v309 = vld [vmem:[#allocation8 + $0x234] sm:$0xff]
    %v310 = vld [vmem:[#allocation8 + $0x23c] sm:$0xf]
    %v311 = vpack.c.bf16 %v212, %v212
    %v312 = vpack.c.bf16 %v213, %v213
    %v313 = vpack.c.bf16 %v214, %v214
    %v314 = vld [vmem:[#allocation11] sm:$0x7]
    %v316 = vperm.slane %v314, 0
    %v317 = vperm.slane %v314, 1
    %v318 = vperm.slane %v314, 2
    %v418 = vunpack.c.l.b16 %v215
    %v419 = vunpack.c.h.b16 %v215
    %v420 = vunpack.c.l.b16 %v216
    %v421 = vunpack.c.l.b16 %v217
    %v422 = vunpack.c.h.b16 %v217
    %v423 = vunpack.c.l.b16 %v218
    %v424 = vunpack.c.l.b16 %v219
    %v425 = vunpack.c.h.b16 %v219
    %v426 = vunpack.c.l.b16 %v220
    %v427 = vunpack.c.l.b16 %v221
    %v428 = vunpack.c.h.b16 %v221
    %v429 = vunpack.c.l.b16 %v222
    %v430 = vunpack.c.l.b16 %v223
    %v431 = vunpack.c.h.b16 %v223
    %v432 = vunpack.c.l.b16 %v224
    %v433 = vunpack.c.l.b16 %v225
    %v434 = vunpack.c.h.b16 %v225
    %v435 = vunpack.c.l.b16 %v226
    %v436 = vunpack.c.l.b16 %v227
    %v437 = vunpack.c.h.b16 %v227
    %v438 = vunpack.c.l.b16 %v228
    %v439 = vunpack.c.l.b16 %v229
    %v440 = vunpack.c.h.b16 %v229
    %v441 = vunpack.c.l.b16 %v230
    %v442 = vunpack.c.l.b16 %v231
    %v443 = vunpack.c.h.b16 %v231
    %v444 = vunpack.c.l.b16 %v232
    %v445 = vunpack.c.l.b16 %v233
    %v446 = vunpack.c.h.b16 %v233
    %v447 = vunpack.c.l.b16 %v234
    %v448 = vunpack.c.l.b16 %v235
    %v449 = vunpack.c.h.b16 %v235
    %v450 = vunpack.c.l.b16 %v236
    %v451 = vunpack.c.l.b16 %v237
    %v452 = vunpack.c.h.b16 %v237
    %v453 = vunpack.c.l.b16 %v238
    %v454 = vunpack.c.l.b16 %v239
    %v455 = vunpack.c.h.b16 %v239
    %v456 = vunpack.c.l.b16 %v240
    %v457 = vunpack.c.l.b16 %v241
    %v458 = vunpack.c.h.b16 %v241
    %v459 = vunpack.c.l.b16 %v242
    %v460 = vunpack.c.l.b16 %v243
    %v461 = vunpack.c.h.b16 %v243
    %v462 = vunpack.c.l.b16 %v244
    %v463 = vunpack.c.l.b16 %v245
    %v464 = vunpack.c.h.b16 %v245
    %v465 = vunpack.c.l.b16 %v246
    %v466 = vunpack.c.l.b16 %v247
    %v467 = vunpack.c.h.b16 %v247
    %v468 = vunpack.c.l.b16 %v248
    %v469 = vunpack.c.l.b16 %v249
    %v470 = vunpack.c.h.b16 %v249
    %v471 = vunpack.c.l.b16 %v250
    %v472 = vunpack.c.l.b16 %v251
    %v473 = vunpack.c.h.b16 %v251
    %v474 = vunpack.c.l.b16 %v252
    %v475 = vunpack.c.l.b16 %v253
    %v476 = vunpack.c.h.b16 %v253
    %v477 = vunpack.c.l.b16 %v254
    %v478 = vunpack.c.l.b16 %v255
    %v479 = vunpack.c.h.b16 %v255
    %v480 = vunpack.c.l.b16 %v256
    %v481 = vunpack.c.l.b16 %v257
    %v482 = vunpack.c.h.b16 %v257
    %v483 = vunpack.c.l.b16 %v258
    %v484 = vunpack.c.l.b16 %v259
    %v485 = vunpack.c.h.b16 %v259
    %v486 = vunpack.c.l.b16 %v260
    %v487 = vunpack.c.l.b16 %v261
    %v488 = vunpack.c.h.b16 %v261
    %v489 = vunpack.c.l.b16 %v262
    %v490 = vunpack.c.l.b16 %v263
    %v491 = vunpack.c.h.b16 %v263
    %v492 = vunpack.c.l.b16 %v264
    %v493 = vunpack.c.l.b16 %v265
    %v494 = vunpack.c.h.b16 %v265
    %v495 = vunpack.c.l.b16 %v266
    %v496 = vunpack.c.l.b16 %v267
    %v497 = vunpack.c.h.b16 %v267
    %v498 = vunpack.c.l.b16 %v268
    %v499 = vunpack.c.l.b16 %v269
    %v500 = vunpack.c.h.b16 %v269
    %v501 = vunpack.c.l.b16 %v270
    %v502 = vunpack.c.l.b16 %v271
    %v503 = vunpack.c.h.b16 %v271
    %v504 = vunpack.c.l.b16 %v272
    %v505 = vunpack.c.l.b16 %v273
    %v506 = vunpack.c.h.b16 %v273
    %v507 = vunpack.c.l.b16 %v274
    %v508 = vunpack.c.l.b16 %v275
    %v509 = vunpack.c.h.b16 %v275
    %v510 = vunpack.c.l.b16 %v276
    %v511 = vunpack.c.l.b16 %v277
    %v512 = vunpack.c.h.b16 %v277
    %v513 = vunpack.c.l.b16 %v278
    %v514 = vunpack.c.l.b16 %v279
    %v515 = vunpack.c.h.b16 %v279
    %v516 = vunpack.c.l.b16 %v280
    %v517 = vunpack.c.l.b16 %v281
    %v518 = vunpack.c.h.b16 %v281
    %v519 = vunpack.c.l.b16 %v282
    %v520 = vunpack.c.l.b16 %v283
    %v521 = vunpack.c.h.b16 %v283
    %v522 = vunpack.c.l.b16 %v284
    %v523 = vunpack.c.l.b16 %v285
    %v524 = vunpack.c.h.b16 %v285
    %v525 = vunpack.c.l.b16 %v286
    %v526 = vunpack.c.l.b16 %v287
    %v527 = vunpack.c.h.b16 %v287
    %v528 = vunpack.c.l.b16 %v288
    %v529 = vunpack.c.l.b16 %v289
    %v530 = vunpack.c.h.b16 %v289
    %v531 = vunpack.c.l.b16 %v290
    %v532 = vunpack.c.l.b16 %v291
    %v533 = vunpack.c.h.b16 %v291
    %v534 = vunpack.c.l.b16 %v292
    %v535 = vunpack.c.l.b16 %v293
    %v536 = vunpack.c.h.b16 %v293
    %v537 = vunpack.c.l.b16 %v294
    %v538 = vunpack.c.l.b16 %v295
    %v539 = vunpack.c.h.b16 %v295
    %v540 = vunpack.c.l.b16 %v296
    %v541 = vunpack.c.l.b16 %v297
    %v542 = vunpack.c.h.b16 %v297
    %v543 = vunpack.c.l.b16 %v298
    %v544 = vunpack.c.l.b16 %v299
    %v545 = vunpack.c.h.b16 %v299
    %v546 = vunpack.c.l.b16 %v300
    %v547 = vunpack.c.l.b16 %v301
    %v548 = vunpack.c.h.b16 %v301
    %v549 = vunpack.c.l.b16 %v302
    %v550 = vunpack.c.l.b16 %v303
    %v551 = vunpack.c.h.b16 %v303
    %v552 = vunpack.c.l.b16 %v304
    %v553 = vunpack.c.l.b16 %v305
    %v554 = vunpack.c.h.b16 %v305
    %v555 = vunpack.c.l.b16 %v306
    %v556 = vunpack.c.l.b16 %v307
    %v557 = vunpack.c.h.b16 %v307
    %v558 = vunpack.c.l.b16 %v308
    %v559 = vunpack.c.l.b16 %v309
    %v560 = vunpack.c.h.b16 %v309
    %v561 = vunpack.c.l.b16 %v310
    %v562 = vpack.c.b16 %v421, %v418
    %v563 = vpack.c.b16 %v422, %v419
    %v564 = vpack.c.b16 %v423, %v420
    %v565 = vpack.c.b16 %v427, %v424
    %v566 = vpack.c.b16 %v428, %v425
    %v567 = vpack.c.b16 %v429, %v426
    %v568 = vpack.c.b16 %v433, %v430
    %v569 = vpack.c.b16 %v434, %v431
    %v570 = vpack.c.b16 %v435, %v432
    %v571 = vpack.c.b16 %v439, %v436
    %v572 = vpack.c.b16 %v440, %v437
    %v573 = vpack.c.b16 %v441, %v438
    %v574 = vpack.c.b16 %v445, %v442
    %v575 = vpack.c.b16 %v446, %v443
    %v576 = vpack.c.b16 %v447, %v444
    %v577 = vpack.c.b16 %v451, %v448
    %v578 = vpack.c.b16 %v452, %v449
    %v579 = vpack.c.b16 %v453, %v450
    %v580 = vpack.c.b16 %v457, %v454
    %v581 = vpack.c.b16 %v458, %v455
    %v582 = vpack.c.b16 %v459, %v456
    %v583 = vpack.c.b16 %v463, %v460
    %v584 = vpack.c.b16 %v464, %v461
    %v585 = vpack.c.b16 %v465, %v462
    %v586 = vpack.c.b16 %v469, %v466
    %v587 = vpack.c.b16 %v470, %v467
    %v588 = vpack.c.b16 %v471, %v468
    %v589 = vpack.c.b16 %v475, %v472
    %v590 = vpack.c.b16 %v476, %v473
    %v591 = vpack.c.b16 %v477, %v474
    %v592 = vpack.c.b16 %v481, %v478
    %v593 = vpack.c.b16 %v482, %v479
    %v594 = vpack.c.b16 %v483, %v480
    %v595 = vpack.c.b16 %v487, %v484
    %v596 = vpack.c.b16 %v488, %v485
    %v597 = vpack.c.b16 %v489, %v486
    %v598 = vpack.c.b16 %v493, %v490
    %v599 = vpack.c.b16 %v494, %v491
    %v600 = vpack.c.b16 %v495, %v492
    %v601 = vpack.c.b16 %v499, %v496
    %v602 = vpack.c.b16 %v500, %v497
    %v603 = vpack.c.b16 %v501, %v498
    %v604 = vpack.c.b16 %v505, %v502
    %v605 = vpack.c.b16 %v506, %v503
    %v606 = vpack.c.b16 %v507, %v504
    %v607 = vpack.c.b16 %v511, %v508
    %v608 = vpack.c.b16 %v512, %v509
    %v609 = vpack.c.b16 %v513, %v510
    %v610 = vpack.c.b16 %v517, %v514
    %v611 = vpack.c.b16 %v518, %v515
    %v612 = vpack.c.b16 %v519, %v516
    %v613 = vpack.c.b16 %v523, %v520
    %v614 = vpack.c.b16 %v524, %v521
    %v615 = vpack.c.b16 %v525, %v522
    %v616 = vpack.c.b16 %v529, %v526
    %v617 = vpack.c.b16 %v530, %v527
    %v618 = vpack.c.b16 %v531, %v528
    %v619 = vpack.c.b16 %v535, %v532
    %v620 = vpack.c.b16 %v536, %v533
    %v621 = vpack.c.b16 %v537, %v534
    %v622 = vpack.c.b16 %v541, %v538
    %v623 = vpack.c.b16 %v542, %v539
    %v624 = vpack.c.b16 %v543, %v540
    %v625 = vpack.c.b16 %v547, %v544
    %v626 = vpack.c.b16 %v548, %v545
    %v627 = vpack.c.b16 %v549, %v546
    %v628 = vpack.c.b16 %v553, %v550
    %v629 = vpack.c.b16 %v554, %v551
    %v630 = vpack.c.b16 %v555, %v552
    %v631 = vpack.c.b16 %v559, %v556
    %v632 = vpack.c.b16 %v560, %v557
    %v633 = vpack.c.b16 %v561, %v558
    %706 = vmatpush.bf16.msra.mxu0 %v583
    %707 = vmatpush.bf16.msra.mxu0 %v580
    %708 = vmatpush.bf16.msra.mxu0 %v577
    %709 = vmatpush.bf16.msra.mxu0 %v574
    %710 = vmatpush.bf16.msra.mxu0 %v571
    %711 = vmatpush.bf16.msra.mxu0 %v568
    %712 = vmatpush.bf16.msra.mxu0 %v565
    %713 = vmatpush.bf16.msra.mxu0 %v562
    %714 = vmatmul.bf16.gmra.mxu0 %v311
    %v715 = vpop.f32.mrf.mxu0
    %v716 = vadd.f32 %v316, %v715
    %v717 = vpop.f32.mrf.mxu0
    %718 = vdwg.mxu0
    %719 = vmatpush.bf16.msra.mxu0 %v607
    %720 = vmatpush.bf16.msra.mxu0 %v604
    %721 = vmatpush.bf16.msra.mxu0 %v601
    %722 = vmatpush.bf16.msra.mxu0 %v598
    %723 = vmatpush.bf16.msra.mxu0 %v595
    %724 = vmatpush.bf16.msra.mxu0 %v592
    %725 = vmatpush.bf16.msra.mxu0 %v589
    %726 = vmatpush.bf16.msra.mxu0 %v586
    %727 = vmatmul.bf16.gmra.mxu0 %v312
    %v728 = vpop.f32.mrf.mxu0
    %v729 = vadd.f32 %v716, %v728
    %v730 = vpop.f32.mrf.mxu0
    %731 = vdwg.mxu0
    %732 = vmatpush.bf16.msra.mxu0 %v631
    %733 = vmatpush.bf16.msra.mxu0 %v628
    %734 = vmatpush.bf16.msra.mxu0 %v625
    %735 = vmatpush.bf16.msra.mxu0 %v622
    %736 = vmatpush.bf16.msra.mxu0 %v619
    %737 = vmatpush.bf16.msra.mxu0 %v616
    %738 = vmatpush.bf16.msra.mxu0 %v613
    %739 = vmatpush.bf16.msra.mxu0 %v610
    %740 = vmatmul.bf16.gmra.mxu0 %v313
    %v741 = vpop.f32.mrf.mxu0
    %v742 = vadd.f32 %v729, %v741
    %v743 = vpop.f32.mrf.mxu0
    %744 = vdwg.mxu0
    %745 = vmatpush.bf16.msra.mxu0 %v584
    %746 = vmatpush.bf16.msra.mxu0 %v581
    %747 = vmatpush.bf16.msra.mxu0 %v578
    %748 = vmatpush.bf16.msra.mxu0 %v575
    %749 = vmatpush.bf16.msra.mxu0 %v572
    %750 = vmatpush.bf16.msra.mxu0 %v569
    %751 = vmatpush.bf16.msra.mxu0 %v566
    %752 = vmatpush.bf16.msra.mxu0 %v563
    %753 = vmatmul.bf16.gmra.mxu0 %v311
    %v754 = vpop.f32.mrf.mxu0
    %v755 = vadd.f32 %v317, %v754
    %v756 = vpop.f32.mrf.mxu0
    %757 = vdwg.mxu0
    %758 = vmatpush.bf16.msra.mxu0 %v608
    %759 = vmatpush.bf16.msra.mxu0 %v605
    %760 = vmatpush.bf16.msra.mxu0 %v602
    %761 = vmatpush.bf16.msra.mxu0 %v599
    %762 = vmatpush.bf16.msra.mxu0 %v596
    %763 = vmatpush.bf16.msra.mxu0 %v593
    %764 = vmatpush.bf16.msra.mxu0 %v590
    %765 = vmatpush.bf16.msra.mxu0 %v587
    %766 = vmatmul.bf16.gmra.mxu0 %v312
    %v767 = vpop.f32.mrf.mxu0
    %v768 = vadd.f32 %v755, %v767
    %v769 = vpop.f32.mrf.mxu0
    %770 = vdwg.mxu0
    %771 = vmatpush.bf16.msra.mxu0 %v632
    %772 = vmatpush.bf16.msra.mxu0 %v629
    %773 = vmatpush.bf16.msra.mxu0 %v626
    %774 = vmatpush.bf16.msra.mxu0 %v623
    %775 = vmatpush.bf16.msra.mxu0 %v620
    %776 = vmatpush.bf16.msra.mxu0 %v617
    %777 = vmatpush.bf16.msra.mxu0 %v614
    %778 = vmatpush.bf16.msra.mxu0 %v611
    %779 = vmatmul.bf16.gmra.mxu0 %v313
    %v780 = vpop.f32.mrf.mxu0
    %v781 = vadd.f32 %v768, %v780
    %v782 = vpop.f32.mrf.mxu0
    %783 = vdwg.mxu0
    %784 = vmatpush.bf16.msra.mxu0 %v585
    %785 = vmatpush.bf16.msra.mxu0 %v582
    %786 = vmatpush.bf16.msra.mxu0 %v579
    %787 = vmatpush.bf16.msra.mxu0 %v576
    %788 = vmatpush.bf16.msra.mxu0 %v573
    %789 = vmatpush.bf16.msra.mxu0 %v570
    %790 = vmatpush.bf16.msra.mxu0 %v567
    %791 = vmatpush.bf16.msra.mxu0 %v564
    %792 = vmatmul.bf16.gmra.mxu0 %v311
    %v793 = vpop.f32.mrf.mxu0
    %v794 = vadd.f32 %v318, %v793
    %v795 = vpop.f32.mrf.mxu0
    %796 = vdwg.mxu0
    %797 = vmatpush.bf16.msra.mxu0 %v609
    %798 = vmatpush.bf16.msra.mxu0 %v606
    %799 = vmatpush.bf16.msra.mxu0 %v603
    %800 = vmatpush.bf16.msra.mxu0 %v600
    %801 = vmatpush.bf16.msra.mxu0 %v597
    %802 = vmatpush.bf16.msra.mxu0 %v594
    %803 = vmatpush.bf16.msra.mxu0 %v591
    %804 = vmatpush.bf16.msra.mxu0 %v588
    %805 = vmatmul.bf16.gmra.mxu0 %v312
    %v806 = vpop.f32.mrf.mxu0
    %v807 = vadd.f32 %v794, %v806
    %v808 = vpop.f32.mrf.mxu0
    %809 = vdwg.mxu0
    %810 = vmatpush.bf16.msra.mxu0 %v633
    %811 = vmatpush.bf16.msra.mxu0 %v630
    %812 = vmatpush.bf16.msra.mxu0 %v627
    %813 = vmatpush.bf16.msra.mxu0 %v624
    %814 = vmatpush.bf16.msra.mxu0 %v621
    %815 = vmatpush.bf16.msra.mxu0 %v618
    %816 = vmatpush.bf16.msra.mxu0 %v615
    %817 = vmatpush.bf16.msra.mxu0 %v612
    %818 = vmatmul.bf16.gmra.mxu0 %v313
    %v819 = vpop.f32.mrf.mxu0
    %v820 = vadd.f32 %v807, %v819
    %v821 = vpop.f32.mrf.mxu0
    %822 = vdwg.mxu0
    %v823 = vmax.f32 %v742, 0.0
    %v824 = vmax.f32 %v781, 0.0
    %v825 = vmax.f32 %v820, 0.0
    %v826 = vld [vmem:[#allocation10] sm:$0xf]
    %v827 = vld [vmem:[#allocation10 + $0x4] sm:$0xf]
    %v828 = vld [vmem:[#allocation10 + $0x8] sm:$0xf]
    %v829 = vld [vmem:[#allocation10 + $0xc] sm:$0xf]
    %v830 = vld [vmem:[#allocation10 + $0x10] sm:$0xf]
    %v831 = vld [vmem:[#allocation10 + $0x14] sm:$0xf]
    %v832 = vld [vmem:[#allocation10 + $0x18] sm:$0xf]
    %v833 = vld [vmem:[#allocation10 + $0x1c] sm:$0xf]
    %v834 = vld [vmem:[#allocation10 + $0x20] sm:$0xf]
    %v835 = vld [vmem:[#allocation10 + $0x24] sm:$0xf]
    %v836 = vld [vmem:[#allocation10 + $0x28] sm:$0xf]
    %v837 = vld [vmem:[#allocation10 + $0x2c] sm:$0xf]
    %v838 = vld [vmem:[#allocation10 + $0x30] sm:$0xf]
    %v839 = vld [vmem:[#allocation10 + $0x34] sm:$0xf]
    %v840 = vld [vmem:[#allocation10 + $0x38] sm:$0xf]
    %v841 = vld [vmem:[#allocation10 + $0x3c] sm:$0xf]
    %v842 = vld [vmem:[#allocation10 + $0x40] sm:$0xf]
    %v843 = vld [vmem:[#allocation10 + $0x44] sm:$0xf]
    %v844 = vld [vmem:[#allocation10 + $0x48] sm:$0xf]
    %v845 = vld [vmem:[#allocation10 + $0x4c] sm:$0xf]
    %v846 = vld [vmem:[#allocation10 + $0x50] sm:$0xf]
    %v847 = vld [vmem:[#allocation10 + $0x54] sm:$0xf]
    %v848 = vld [vmem:[#allocation10 + $0x58] sm:$0xf]
    %v849 = vld [vmem:[#allocation10 + $0x5c] sm:$0xf]
    %v850 = vld [vmem:[#allocation10 + $0x60] sm:$0xf]
    %v851 = vld [vmem:[#allocation10 + $0x64] sm:$0xf]
    %v852 = vld [vmem:[#allocation10 + $0x68] sm:$0xf]
    %v853 = vld [vmem:[#allocation10 + $0x6c] sm:$0xf]
    %v854 = vld [vmem:[#allocation10 + $0x70] sm:$0xf]
    %v855 = vld [vmem:[#allocation10 + $0x74] sm:$0xf]
    %v856 = vld [vmem:[#allocation10 + $0x78] sm:$0xf]
    %v857 = vld [vmem:[#allocation10 + $0x7c] sm:$0xf]
    %v858 = vld [vmem:[#allocation10 + $0x80] sm:$0xf]
    %v859 = vld [vmem:[#allocation10 + $0x84] sm:$0xf]
    %v860 = vld [vmem:[#allocation10 + $0x88] sm:$0xf]
    %v861 = vld [vmem:[#allocation10 + $0x8c] sm:$0xf]
    %v862 = vld [vmem:[#allocation10 + $0x90] sm:$0xf]
    %v863 = vld [vmem:[#allocation10 + $0x94] sm:$0xf]
    %v864 = vld [vmem:[#allocation10 + $0x98] sm:$0xf]
    %v865 = vld [vmem:[#allocation10 + $0x9c] sm:$0xf]
    %v866 = vld [vmem:[#allocation10 + $0xa0] sm:$0xf]
    %v867 = vld [vmem:[#allocation10 + $0xa4] sm:$0xf]
    %v868 = vld [vmem:[#allocation10 + $0xa8] sm:$0xf]
    %v869 = vld [vmem:[#allocation10 + $0xac] sm:$0xf]
    %v870 = vld [vmem:[#allocation10 + $0xb0] sm:$0xf]
    %v871 = vld [vmem:[#allocation10 + $0xb4] sm:$0xf]
    %v872 = vld [vmem:[#allocation10 + $0xb8] sm:$0xf]
    %v873 = vld [vmem:[#allocation10 + $0xbc] sm:$0xf]
    %v874 = vpack.c.bf16 %v823, %v823
    %v875 = vpack.c.bf16 %v824, %v824
    %v876 = vpack.c.bf16 %v825, %v825
    %v877 = vld [vmem:[%s7] sm:$0x1]
    %v879 = vperm.slane %v877, 0
    %v929 = vunpack.c.l.b16 %v826
    %v930 = vunpack.c.l.b16 %v827
    %v931 = vunpack.c.l.b16 %v828
    %v932 = vunpack.c.l.b16 %v829
    %v933 = vunpack.c.l.b16 %v830
    %v934 = vunpack.c.l.b16 %v831
    %v935 = vunpack.c.l.b16 %v832
    %v936 = vunpack.c.l.b16 %v833
    %v937 = vunpack.c.l.b16 %v834
    %v938 = vunpack.c.l.b16 %v835
    %v939 = vunpack.c.l.b16 %v836
    %v940 = vunpack.c.l.b16 %v837
    %v941 = vunpack.c.l.b16 %v838
    %v942 = vunpack.c.l.b16 %v839
    %v943 = vunpack.c.l.b16 %v840
    %v944 = vunpack.c.l.b16 %v841
    %v945 = vunpack.c.l.b16 %v842
    %v946 = vunpack.c.l.b16 %v843
    %v947 = vunpack.c.l.b16 %v844
    %v948 = vunpack.c.l.b16 %v845
    %v949 = vunpack.c.l.b16 %v846
    %v950 = vunpack.c.l.b16 %v847
    %v951 = vunpack.c.l.b16 %v848
    %v952 = vunpack.c.l.b16 %v849
    %v953 = vunpack.c.l.b16 %v850
    %v954 = vunpack.c.l.b16 %v851
    %v955 = vunpack.c.l.b16 %v852
    %v956 = vunpack.c.l.b16 %v853
    %v957 = vunpack.c.l.b16 %v854
    %v958 = vunpack.c.l.b16 %v855
    %v959 = vunpack.c.l.b16 %v856
    %v960 = vunpack.c.l.b16 %v857
    %v961 = vunpack.c.l.b16 %v858
    %v962 = vunpack.c.l.b16 %v859
    %v963 = vunpack.c.l.b16 %v860
    %v964 = vunpack.c.l.b16 %v861
    %v965 = vunpack.c.l.b16 %v862
    %v966 = vunpack.c.l.b16 %v863
    %v967 = vunpack.c.l.b16 %v864
    %v968 = vunpack.c.l.b16 %v865
    %v969 = vunpack.c.l.b16 %v866
    %v970 = vunpack.c.l.b16 %v867
    %v971 = vunpack.c.l.b16 %v868
    %v972 = vunpack.c.l.b16 %v869
    %v973 = vunpack.c.l.b16 %v870
    %v974 = vunpack.c.l.b16 %v871
    %v975 = vunpack.c.l.b16 %v872
    %v976 = vunpack.c.l.b16 %v873
    %v977 = vpack.c.b16 %v930, %v929
    %v978 = vpack.c.b16 %v932, %v931
    %v979 = vpack.c.b16 %v934, %v933
    %v980 = vpack.c.b16 %v936, %v935
    %v981 = vpack.c.b16 %v938, %v937
    %v982 = vpack.c.b16 %v940, %v939
    %v983 = vpack.c.b16 %v942, %v941
    %v984 = vpack.c.b16 %v944, %v943
    %v985 = vpack.c.b16 %v946, %v945
    %v986 = vpack.c.b16 %v948, %v947
    %v987 = vpack.c.b16 %v950, %v949
    %v988 = vpack.c.b16 %v952, %v951
    %v989 = vpack.c.b16 %v954, %v953
    %v990 = vpack.c.b16 %v956, %v955
    %v991 = vpack.c.b16 %v958, %v957
    %v992 = vpack.c.b16 %v960, %v959
    %v993 = vpack.c.b16 %v962, %v961
    %v994 = vpack.c.b16 %v964, %v963
    %v995 = vpack.c.b16 %v966, %v965
    %v996 = vpack.c.b16 %v968, %v967
    %v997 = vpack.c.b16 %v970, %v969
    %v998 = vpack.c.b16 %v972, %v971
    %v999 = vpack.c.b16 %v974, %v973
    %v1000 = vpack.c.b16 %v976, %v975
    %1025 = vmatpush.bf16.msra.mxu0 %v984
    %1026 = vmatpush.bf16.msra.mxu0 %v983
    %1027 = vmatpush.bf16.msra.mxu0 %v982
    %1028 = vmatpush.bf16.msra.mxu0 %v981
    %1029 = vmatpush.bf16.msra.mxu0 %v980
    %1030 = vmatpush.bf16.msra.mxu0 %v979
    %1031 = vmatpush.bf16.msra.mxu0 %v978
    %1032 = vmatpush.bf16.msra.mxu0 %v977
    %1033 = vmatmul.bf16.gmra.mxu0 %v874
    %v1034 = vpop.f32.mrf.mxu0
    %v1035 = vadd.f32 %v879, %v1034
    %v1036 = vpop.f32.mrf.mxu0
    %1037 = vdwg.mxu0
    %1038 = vmatpush.bf16.msra.mxu0 %v992
    %1039 = vmatpush.bf16.msra.mxu0 %v991
    %1040 = vmatpush.bf16.msra.mxu0 %v990
    %1041 = vmatpush.bf16.msra.mxu0 %v989
    %1042 = vmatpush.bf16.msra.mxu0 %v988
    %1043 = vmatpush.bf16.msra.mxu0 %v987
    %1044 = vmatpush.bf16.msra.mxu0 %v986
    %1045 = vmatpush.bf16.msra.mxu0 %v985
    %1046 = vmatmul.bf16.gmra.mxu0 %v875
    %v1047 = vpop.f32.mrf.mxu0
    %v1048 = vadd.f32 %v1035, %v1047
    %v1049 = vpop.f32.mrf.mxu0
    %1050 = vdwg.mxu0
    %1051 = vmatpush.bf16.msra.mxu0 %v1000
    %1052 = vmatpush.bf16.msra.mxu0 %v999
    %1053 = vmatpush.bf16.msra.mxu0 %v998
    %1054 = vmatpush.bf16.msra.mxu0 %v997
    %1055 = vmatpush.bf16.msra.mxu0 %v996
    %1056 = vmatpush.bf16.msra.mxu0 %v995
    %1057 = vmatpush.bf16.msra.mxu0 %v994
    %1058 = vmatpush.bf16.msra.mxu0 %v993
    %1059 = vmatmul.bf16.gmra.mxu0 %v876
    %v1060 = vpop.f32.mrf.mxu0
    %v1061 = vadd.f32 %v1048, %v1060
    %v1062 = vpop.f32.mrf.mxu0
    %1063 = vdwg.mxu0
    %v1064 = vld [vmem:[#allocation5] sm:$0x1]
    %vm1065 = vcmp.gt.f32.partialorder %v1064, 0.5
    %v1066 = vtanh.pop %v1061
    %v1067 = vsel %vm1065, 1, 0
    %v1068 = vperm.slane %v1067, 0
    %vm1069 = vcmp.eq.s32.totalorder %v1068, 1
    %v1070 = vsel %vm1069, %v1066, %v1061
    %1071 = vst [vmem:[#allocation13] sm:$0xff] %v1070
    // Predicated region
    $region58: #{tpu_custom_call.1} parent=1 // pred_check
      _
    $region59: #{tpu_custom_call.1} parent=1 // pred_check_branch
      %1073 = sbr.rel (0) target = $region61
    $region60: #{tpu_custom_call.1} parent=1 // pred_region
      %1075 = vsyncadd [#allocation4], 0
      %s1077 = sshll.u32 [#allocation13], 4
      %s1078 = int_to_ptr.vmem [resolvable:$true] %s1077
      %s1079 = sshll.u32 %s8, 4
      %s1080 = int_to_ptr.hbm [resolvable:$true] %s1079
      %1082 = dma.vmem_to_hbm [thread:$0]  %s1078, 128, %s1080, [#allocation4]
    $region61: #{tpu_custom_call.1} parent=1 // pred_fallthru
      _
    // Predicated region
    $region62: #{tpu_custom_call.1} parent=1 // pred_check
      _
    $region63: #{tpu_custom_call.1} parent=1 // pred_check_branch
      %1084 = sbr.rel (0) target = $region65
    $region64: #{tpu_custom_call.1} parent=1 // pred_region
      %1086 = dma.done [#allocation4], 128
    $region65: #{tpu_custom_call.1} parent=1 // pred_fallthru
      _
    %1087 = vsyncpa [#allocation3], 1
    %1088 = vsyncpa [#allocation6], 1
    %1089 = vsyncpa [#allocation9], 1
    %1090 = vsyncpa [#allocation12], 1
    %1091 = vsyncpa [#allocation4], 1

</llo_original>
